<compile_context>
chip_gen: v6e
topology: v6e:2x2x1
jax: 0.10.0
libtpu: 0.0.40
codegen_flags: <defaults>
</compile_context>

<pallas_src>
import jax
import jax.numpy as jnp
from jax.experimental import pallas as pl
from jax.experimental.pallas import tpu as pltpu


def _round_up(x, m):
    return (x + m - 1) // m * m


def _stacked_lstm_kernel(x_ref, h0_ref, c0_ref, w_ref, b_ref,
                         h1_ref, c1_ref, zcat_ref):
    """All L layers in one invocation; weights stay VMEM-resident.

    zcat_ref (bf16) is the fused matmul LHS [feed-forward input | h_l]:
      columns [0, D_in)        feed-forward input of the current layer
      columns [D_in, D_in + H) recurrent hidden state h_0[l]
    """
    L, B, H = h0_ref.shape            # B is already padded to a multiple of 16
    D_in = zcat_ref.shape[1] - H      # padded feed-forward width (128-multiple)
    in_sz = x_ref.shape[1]            # raw layer-0 input width

    # Layer-0 feed-forward input: raw x; pad columns zeroed in-kernel
    # (no wrapper-side x_pad materialisation / extra HBM round trip).
    if in_sz < D_in:
        zcat_ref[:, in_sz:D_in] = jnp.zeros((B, D_in - in_sz), zcat_ref.dtype)
    zcat_ref[:, :in_sz] = x_ref[...].astype(zcat_ref.dtype)

    # Statically unrolled loop over the serially-dependent layers (L is small).
    for l in range(L):
        zcat_ref[:, D_in:] = h0_ref[l].astype(zcat_ref.dtype)

        # Single fused MXU matmul: (B, D_in+H) @ (D_in+H, 4H), f32 accumulate.
        gates = jnp.dot(zcat_ref[...], w_ref[l],
                        preferred_element_type=jnp.float32) + b_ref[l]

        i_g = jax.nn.sigmoid(gates[:, 0 * H:1 * H])
        f_g = jax.nn.sigmoid(gates[:, 1 * H:2 * H])
        g_g = jnp.tanh(gates[:, 2 * H:3 * H])
        o_g = jax.nn.sigmoid(gates[:, 3 * H:4 * H])

        c_new = f_g * c0_ref[l] + i_g * g_g          # f32 cell update
        h_new = o_g * jnp.tanh(c_new)

        h1_ref[l] = h_new.astype(h1_ref.dtype)
        c1_ref[l] = c_new.astype(c1_ref.dtype)

        if l + 1 < L:
            if l == 0 and D_in > H:
                # One-time zeroing of columns [H, D_in): clears the stale
                # layer-0-x columns so correctness does not depend on the
                # zero-padded weight rows of layers l > 0.
                zcat_ref[:, H:D_in] = jnp.zeros((B, D_in - H), zcat_ref.dtype)
            # TODO(synk): train-mode inter-layer nn.Dropout is identity here
            # (eval mode); fusing it would need pltpu.prng_* in-kernel.
            zcat_ref[:, :H] = h_new.astype(zcat_ref.dtype)


def init_stacked_lstm_params(key, num_layers, input_size, rnn_size):
    """Deterministic PyTorch-style init: U(-1/sqrt(H), 1/sqrt(H)), f32."""
    params = []
    bound = 1.0 / jnp.sqrt(jnp.float32(rnn_size))
    in_sz = input_size
    for _ in range(num_layers):
        key, k1, k2, k3, k4 = jax.random.split(key, 5)
        w_ih = jax.random.uniform(k1, (in_sz, 4 * rnn_size), jnp.float32, -bound, bound)
        w_hh = jax.random.uniform(k2, (rnn_size, 4 * rnn_size), jnp.float32, -bound, bound)
        b_ih = jax.random.uniform(k3, (4 * rnn_size,), jnp.float32, -bound, bound)
        b_hh = jax.random.uniform(k4, (4 * rnn_size,), jnp.float32, -bound, bound)
        params.append({"w_ih": w_ih, "w_hh": w_hh,
                       "b": (b_ih + b_hh).reshape(1, 4 * rnn_size)})
        in_sz = rnn_size
    return params


def prepare_fused_params(params, input_size, rnn_size, weight_dtype=jnp.bfloat16):
    """Stack per-layer LSTMCell params into fused (L, D_pad+H, 4H) bf16 weights."""
    H = rnn_size
    D_pad = _round_up(max(input_size, rnn_size), 128)
    w_stk, b_stk = [], []
    for p in params:
        w_ih = p["w_ih"]                                       # (in_sz, 4H)
        in_sz = w_ih.shape[0]
        w_ih_pad = jnp.zeros((D_pad, 4 * H), w_ih.dtype).at[:in_sz].set(w_ih)
        w_stk.append(jnp.concatenate([w_ih_pad, p["w_hh"]], axis=0))  # (D_pad+H, 4H)
        b_stk.append(p["b"])
    w_all = jnp.stack(w_stk).astype(weight_dtype)              # (L, D_pad+H, 4H)
    b_all = jnp.stack(b_stk).astype(jnp.float32)               # (L, 1, 4H)
    return w_all, b_all, D_pad


@jax.jit
def stacked_lstm_forward_fused(w_all, b_all, x, h_0, c_0):
    """Matches StackedLSTM.forward in eval mode: returns (output, (h_1, c_1)).

    # TODO(synk): if this is driven per-timestep by an outer scan, the next
    # structural win is fusing the time loop into this kernel so the VMEM-
    # resident weights are DMA'd from HBM once per sequence, not once per step.
    """
    L, B, H = h_0.shape
    in_sz = x.shape[1]
    D = w_all.shape[1] - H            # padded feed-forward width (D_pad)

    # Pad batch to a multiple of 16 so every bf16 zcat store is a full,
    # unmasked packed vreg store (no-op when B is already a multiple of 16).
    B_pad = _round_up(B, 16)
    if B_pad != B:
        x = jnp.zeros((B_pad, in_sz), x.dtype).at[:B].set(x)
        h_0 = jnp.zeros((L, B_pad, H), h_0.dtype).at[:, :B].set(h_0)
        c_0 = jnp.zeros((L, B_pad, H), c_0.dtype).at[:, :B].set(c_0)

    def nbytes(a):
        return a.size * a.dtype.itemsize

    weight_bytes = nbytes(w_all) + nbytes(b_all)
    state_bytes = 2 * (nbytes(h_0) + nbytes(c_0))              # inputs + outputs
    zcat_bytes = B_pad * (D + H) * 2                           # bf16 scratch
    needed = weight_bytes + state_bytes + nbytes(x) + zcat_bytes
    # Never lower the scoped default; cap at v7x-safe 64 MiB (usage at these
    # sizes is ~1-2 MB, so the limit only matters when H scales up).
    vmem_limit = int(min(max(2 * needed, 32 * 1024 * 1024), 64 * 1024 * 1024))

    cost = pl.CostEstimate(
        flops=2 * L * B_pad * (D + H) * 4 * H,
        transcendentals=5 * L * B_pad * H,
        bytes_accessed=weight_bytes + state_bytes + nbytes(x),
    )

    vmem = pltpu.MemorySpace.VMEM
    h_1, c_1 = pl.pallas_call(
        _stacked_lstm_kernel,
        out_shape=(jax.ShapeDtypeStruct((L, B_pad, H), jnp.float32),
                   jax.ShapeDtypeStruct((L, B_pad, H), jnp.float32)),
        in_specs=[pl.BlockSpec(memory_space=vmem)] * 5,
        out_specs=(pl.BlockSpec(memory_space=vmem),
                   pl.BlockSpec(memory_space=vmem)),
        scratch_shapes=[pltpu.VMEM((B_pad, D + H), jnp.bfloat16)],   # [input | h]
        input_output_aliases={1: 0, 2: 1},      # h_0 -> h_1, c_0 -> c_1 in place
        compiler_params=pltpu.CompilerParams(vmem_limit_bytes=vmem_limit),
        cost_estimate=cost,
    )(x, h_0, c_0, w_all, b_all)

    if B_pad != B:
        h_1 = h_1[:, :B]
        c_1 = c_1[:, :B]
    return h_1[L - 1], (h_1, c_1)


# ---------------------------------------------------------------------------
# References for correctness checking
# ---------------------------------------------------------------------------
def _reference_forward_bf16(w_all, b_all, x, h_0, c_0, d_pad):
    """Pure-JAX mirror of the kernel's numerics (bf16 matmul, f32 update)."""
    L, B, H = h_0.shape
    in_sz = x.shape[1]
    inp = jnp.zeros((B, d_pad), jnp.float32).at[:, :in_sz].set(x)
    h_1, c_1 = [], []
    for l in range(L):
        z = jnp.concatenate([inp, h_0[l]], axis=1).astype(jnp.bfloat16)
        gates = jnp.dot(z, w_all[l], preferred_element_type=jnp.float32) + b_all[l]
        i_g = jax.nn.sigmoid(gates[:, 0 * H:1 * H])
        f_g = jax.nn.sigmoid(gates[:, 1 * H:2 * H])
        g_g = jnp.tanh(gates[:, 2 * H:3 * H])
        o_g = jax.nn.sigmoid(gates[:, 3 * H:4 * H])
        c_i = f_g * c_0[l] + i_g * g_g
        h_i = o_g * jnp.tanh(c_i)
        inp = jnp.zeros((B, d_pad), jnp.float32).at[:, :H].set(h_i)
        h_1.append(h_i)
        c_1.append(c_i)
    return h_1[-1], (jnp.stack(h_1), jnp.stack(c_1))


def _reference_forward_f32(params, x, h_0, c_0):
    """Full-f32 reference of the original module (eval mode)."""
    inp = x
    H = h_0.shape[-1]
    h_1, c_1 = [], []
    for i, p in enumerate(params):
        gates = inp @ p["w_ih"] + h_0[i] @ p["w_hh"] + p["b"]
        i_g = jax.nn.sigmoid(gates[:, 0 * H:1 * H])
        f_g = jax.nn.sigmoid(gates[:, 1 * H:2 * H])
        g_g = jnp.tanh(gates[:, 2 * H:3 * H])
        o_g = jax.nn.sigmoid(gates[:, 3 * H:4 * H])
        c_i = f_g * c_0[i] + i_g * g_g
        h_i = o_g * jnp.tanh(c_i)
        inp = h_i
        h_1.append(h_i)
        c_1.append(c_i)
    return inp, (jnp.stack(h_1), jnp.stack(c_1))


if __name__ == "__main__":
    num_layers = 3
    batch = 8            # not a multiple of 16: exercises the batch-padding path
    input_size = 256     # != rnn_size: exercises the D_pad feed-forward padding
    rnn_size = 128

    key = jax.random.PRNGKey(0)
    key, kp, kx, kh, kc = jax.random.split(key, 5)

    params = init_stacked_lstm_params(kp, num_layers, input_size, rnn_size)
    x = jax.random.normal(kx, (batch, input_size), jnp.float32)
    h_0 = jax.random.normal(kh, (num_layers, batch, rnn_size), jnp.float32)
    c_0 = jax.random.normal(kc, (num_layers, batch, rnn_size), jnp.float32)

    w_all, b_all, d_pad = prepare_fused_params(params, input_size, rnn_size)

    out, (h_1, c_1) = stacked_lstm_forward_fused(w_all, b_all, x, h_0, c_0)
    jax.block_until_ready((out, h_1, c_1))

    # Tight check vs a pure-JAX mirror with the same bf16-matmul numerics.
    out_b, (h_b, c_b) = _reference_forward_bf16(w_all, b_all, x, h_0, c_0, d_pad)
    assert jnp.allclose(out, out_b, atol=1e-3, rtol=1e-3)
    assert jnp.allclose(h_1, h_b, atol=1e-3, rtol=1e-3)
    assert jnp.allclose(c_1, c_b, atol=1e-3, rtol=1e-3)

    # Loose check vs the full-f32 reference (bf16 matmul operands => ~1e-2 error).
    out_r, (h_r, c_r) = _reference_forward_f32(params, x, h_0, c_0)
    assert jnp.allclose(out, out_r, atol=5e-2, rtol=5e-2)
    assert jnp.allclose(h_1, h_r, atol=5e-2, rtol=5e-2)
    assert jnp.allclose(c_1, c_r, atol=5e-2, rtol=5e-2)

    print("KERNEL_OK")
</pallas_src>

<mosaic_0001>
module attributes {stable_mosaic.version = 11 : i64} {
  func.func @_stacked_lstm_kernel(%arg0: memref<16x256xf32, #tpu.memory_space<vmem>>, %arg1: memref<3x16x128xf32, #tpu.memory_space<vmem>>, %arg2: memref<3x16x128xf32, #tpu.memory_space<vmem>>, %arg3: memref<3x384x512xbf16, #tpu.memory_space<vmem>>, %arg4: memref<3x1x512xf32, #tpu.memory_space<vmem>>, %arg5: memref<3x16x128xf32, #tpu.memory_space<vmem>>, %arg6: memref<3x16x128xf32, #tpu.memory_space<vmem>>, %arg7: memref<16x384xbf16, #tpu.memory_space<vmem>>) attributes {dimension_semantics = [], scalar_prefetch = 0 : i64, scratch_operands = 1 : i64, tpu.core_type = #tpu.core_type<tc>} {
    %c0 = arith.constant 0 : index
    %c0_0 = arith.constant 0 : index
    %0 = vector.load %arg0[%c0, %c0_0] : memref<16x256xf32, #tpu.memory_space<vmem>>, vector<16x256xf32>
    %1 = arith.truncf %0 : vector<16x256xf32> to vector<16x256xbf16>
    %c0_1 = arith.constant 0 : index
    %c0_2 = arith.constant 0 : index
    %2 = vector.load %arg7[%c0_1, %c0_2] : memref<16x384xbf16, #tpu.memory_space<vmem>>, vector<16x256xbf16>
    tpu.vector_store %arg7[%c0_1, %c0_2], %1 {strides = array<i32>} : memref<16x384xbf16, #tpu.memory_space<vmem>>, vector<16x256xbf16>,
    %c0_3 = arith.constant 0 : index
    %c0_4 = arith.constant 0 : index
    %c0_5 = arith.constant 0 : index
    %3 = vector.load %arg1[%c0_3, %c0_4, %c0_5] : memref<3x16x128xf32, #tpu.memory_space<vmem>>, vector<1x16x128xf32>
    %4 = vector.shape_cast %3 : vector<1x16x128xf32> to vector<16x128xf32>
    %5 = arith.truncf %4 : vector<16x128xf32> to vector<16x128xbf16>
    %c0_6 = arith.constant 0 : index
    %c256 = arith.constant 256 : index
    %6 = vector.load %arg7[%c0_6, %c256] : memref<16x384xbf16, #tpu.memory_space<vmem>>, vector<16x128xbf16>
    tpu.vector_store %arg7[%c0_6, %c256], %5 {strides = array<i32>} : memref<16x384xbf16, #tpu.memory_space<vmem>>, vector<16x128xbf16>,
    %c0_7 = arith.constant 0 : index
    %c0_8 = arith.constant 0 : index
    %7 = vector.load %arg7[%c0_7, %c0_8] : memref<16x384xbf16, #tpu.memory_space<vmem>>, vector<16x384xbf16>
    %c0_9 = arith.constant 0 : index
    %c0_10 = arith.constant 0 : index
    %c0_11 = arith.constant 0 : index
    %8 = vector.load %arg3[%c0_9, %c0_10, %c0_11] : memref<3x384x512xbf16, #tpu.memory_space<vmem>>, vector<1x384x512xbf16>
    %9 = vector.shape_cast %8 : vector<1x384x512xbf16> to vector<384x512xbf16>
    %cst = arith.constant dense<0.000000e+00> : vector<16x512xf32>
    %10 = tpu.matmul %7, %9, %cst {dimension_numbers = #tpu.dot_dimension_numbers<[1], [0], [0], [1], [0, 0, 1, 1], [], []>} : vector<16x384xbf16>, vector<384x512xbf16>, vector<16x512xf32> -> vector<16x512xf32>
    %c0_12 = arith.constant 0 : index
    %c0_13 = arith.constant 0 : index
    %c0_14 = arith.constant 0 : index
    %11 = vector.load %arg4[%c0_12, %c0_13, %c0_14] : memref<3x1x512xf32, #tpu.memory_space<vmem>>, vector<1x1x512xf32>
    %12 = vector.shape_cast %11 : vector<1x1x512xf32> to vector<1x512xf32>
    %13 = vector.broadcast %12 : vector<1x512xf32> to vector<16x512xf32>
    %14 = arith.addf %10, %13 : vector<16x512xf32>
    %15 = vector.extract_strided_slice %14 {offsets = [0, 0], sizes = [16, 128], strides = [1, 1]} : vector<16x512xf32> to vector<16x128xf32>
    %16 = arith.negf %15 : vector<16x128xf32>
    %17 = math.exp %16 : vector<16x128xf32>
    %cst_15 = arith.constant 1.000000e+00 : f32
    %18 = vector.broadcast %cst_15 : f32 to vector<16x128xf32>
    %19 = arith.addf %18, %17 : vector<16x128xf32>
    %20 = arith.divf %18, %19 : vector<16x128xf32>
    %21 = vector.extract_strided_slice %14 {offsets = [0, 128], sizes = [16, 128], strides = [1, 1]} : vector<16x512xf32> to vector<16x128xf32>
    %22 = arith.negf %21 : vector<16x128xf32>
    %23 = math.exp %22 : vector<16x128xf32>
    %cst_16 = arith.constant 1.000000e+00 : f32
    %24 = vector.broadcast %cst_16 : f32 to vector<16x128xf32>
    %25 = arith.addf %24, %23 : vector<16x128xf32>
    %26 = arith.divf %24, %25 : vector<16x128xf32>
    %27 = vector.extract_strided_slice %14 {offsets = [0, 256], sizes = [16, 128], strides = [1, 1]} : vector<16x512xf32> to vector<16x128xf32>
    %28 = math.tanh %27 : vector<16x128xf32>
    %29 = vector.extract_strided_slice %14 {offsets = [0, 384], sizes = [16, 128], strides = [1, 1]} : vector<16x512xf32> to vector<16x128xf32>
    %30 = arith.negf %29 : vector<16x128xf32>
    %31 = math.exp %30 : vector<16x128xf32>
    %cst_17 = arith.constant 1.000000e+00 : f32
    %32 = vector.broadcast %cst_17 : f32 to vector<16x128xf32>
    %33 = arith.addf %32, %31 : vector<16x128xf32>
    %34 = arith.divf %32, %33 : vector<16x128xf32>
    %c0_18 = arith.constant 0 : index
    %c0_19 = arith.constant 0 : index
    %c0_20 = arith.constant 0 : index
    %35 = vector.load %arg2[%c0_18, %c0_19, %c0_20] : memref<3x16x128xf32, #tpu.memory_space<vmem>>, vector<1x16x128xf32>
    %36 = vector.shape_cast %35 : vector<1x16x128xf32> to vector<16x128xf32>
    %37 = arith.mulf %26, %36 : vector<16x128xf32>
    %38 = arith.mulf %20, %28 : vector<16x128xf32>
    %39 = arith.addf %37, %38 : vector<16x128xf32>
    %40 = math.tanh %39 : vector<16x128xf32>
    %41 = arith.mulf %34, %40 : vector<16x128xf32>
    %c0_21 = arith.constant 0 : index
    %c0_22 = arith.constant 0 : index
    %c0_23 = arith.constant 0 : index
    %42 = vector.load %arg5[%c0_21, %c0_22, %c0_23] : memref<3x16x128xf32, #tpu.memory_space<vmem>>, vector<1x16x128xf32>
    %43 = vector.shape_cast %42 : vector<1x16x128xf32> to vector<16x128xf32>
    %44 = vector.shape_cast %41 : vector<16x128xf32> to vector<1x16x128xf32>
    tpu.vector_store %arg5[%c0_21, %c0_22, %c0_23], %44 {strides = array<i32>} : memref<3x16x128xf32, #tpu.memory_space<vmem>>, vector<1x16x128xf32>,
    %c0_24 = arith.constant 0 : index
    %c0_25 = arith.constant 0 : index
    %c0_26 = arith.constant 0 : index
    %45 = vector.load %arg6[%c0_24, %c0_25, %c0_26] : memref<3x16x128xf32, #tpu.memory_space<vmem>>, vector<1x16x128xf32>
    %46 = vector.shape_cast %45 : vector<1x16x128xf32> to vector<16x128xf32>
    %47 = vector.shape_cast %39 : vector<16x128xf32> to vector<1x16x128xf32>
    tpu.vector_store %arg6[%c0_24, %c0_25, %c0_26], %47 {strides = array<i32>} : memref<3x16x128xf32, #tpu.memory_space<vmem>>, vector<1x16x128xf32>,
    %cst_27 = arith.constant 0.000000e+00 : bf16
    %48 = vector.broadcast %cst_27 : bf16 to vector<16x128xbf16>
    %c0_28 = arith.constant 0 : index
    %c128 = arith.constant 128 : index
    %49 = vector.load %arg7[%c0_28, %c128] : memref<16x384xbf16, #tpu.memory_space<vmem>>, vector<16x128xbf16>
    tpu.vector_store %arg7[%c0_28, %c128], %48 {strides = array<i32>} : memref<16x384xbf16, #tpu.memory_space<vmem>>, vector<16x128xbf16>,
    %50 = arith.truncf %41 : vector<16x128xf32> to vector<16x128xbf16>
    %c0_29 = arith.constant 0 : index
    %c0_30 = arith.constant 0 : index
    %51 = vector.load %arg7[%c0_29, %c0_30] : memref<16x384xbf16, #tpu.memory_space<vmem>>, vector<16x128xbf16>
    tpu.vector_store %arg7[%c0_29, %c0_30], %50 {strides = array<i32>} : memref<16x384xbf16, #tpu.memory_space<vmem>>, vector<16x128xbf16>,
    %c1 = arith.constant 1 : index
    %c0_31 = arith.constant 0 : index
    %c0_32 = arith.constant 0 : index
    %52 = vector.load %arg1[%c1, %c0_31, %c0_32] : memref<3x16x128xf32, #tpu.memory_space<vmem>>, vector<1x16x128xf32>
    %53 = vector.shape_cast %52 : vector<1x16x128xf32> to vector<16x128xf32>
    %54 = arith.truncf %53 : vector<16x128xf32> to vector<16x128xbf16>
    %c0_33 = arith.constant 0 : index
    %c256_34 = arith.constant 256 : index
    %55 = vector.load %arg7[%c0_33, %c256_34] : memref<16x384xbf16, #tpu.memory_space<vmem>>, vector<16x128xbf16>
    tpu.vector_store %arg7[%c0_33, %c256_34], %54 {strides = array<i32>} : memref<16x384xbf16, #tpu.memory_space<vmem>>, vector<16x128xbf16>,
    %c0_35 = arith.constant 0 : index
    %c0_36 = arith.constant 0 : index
    %56 = vector.load %arg7[%c0_35, %c0_36] : memref<16x384xbf16, #tpu.memory_space<vmem>>, vector<16x384xbf16>
    %c1_37 = arith.constant 1 : index
    %c0_38 = arith.constant 0 : index
    %c0_39 = arith.constant 0 : index
    %57 = vector.load %arg3[%c1_37, %c0_38, %c0_39] : memref<3x384x512xbf16, #tpu.memory_space<vmem>>, vector<1x384x512xbf16>
    %58 = vector.shape_cast %57 : vector<1x384x512xbf16> to vector<384x512xbf16>
    %cst_40 = arith.constant dense<0.000000e+00> : vector<16x512xf32>
    %59 = tpu.matmul %56, %58, %cst_40 {dimension_numbers = #tpu.dot_dimension_numbers<[1], [0], [0], [1], [0, 0, 1, 1], [], []>} : vector<16x384xbf16>, vector<384x512xbf16>, vector<16x512xf32> -> vector<16x512xf32>
    %c1_41 = arith.constant 1 : index
    %c0_42 = arith.constant 0 : index
    %c0_43 = arith.constant 0 : index
    %60 = vector.load %arg4[%c1_41, %c0_42, %c0_43] : memref<3x1x512xf32, #tpu.memory_space<vmem>>, vector<1x1x512xf32>
    %61 = vector.shape_cast %60 : vector<1x1x512xf32> to vector<1x512xf32>
    %62 = vector.broadcast %61 : vector<1x512xf32> to vector<16x512xf32>
    %63 = arith.addf %59, %62 : vector<16x512xf32>
    %64 = vector.extract_strided_slice %63 {offsets = [0, 0], sizes = [16, 128], strides = [1, 1]} : vector<16x512xf32> to vector<16x128xf32>
    %65 = arith.negf %64 : vector<16x128xf32>
    %66 = math.exp %65 : vector<16x128xf32>
    %cst_44 = arith.constant 1.000000e+00 : f32
    %67 = vector.broadcast %cst_44 : f32 to vector<16x128xf32>
    %68 = arith.addf %67, %66 : vector<16x128xf32>
    %69 = arith.divf %67, %68 : vector<16x128xf32>
    %70 = vector.extract_strided_slice %63 {offsets = [0, 128], sizes = [16, 128], strides = [1, 1]} : vector<16x512xf32> to vector<16x128xf32>
    %71 = arith.negf %70 : vector<16x128xf32>
    %72 = math.exp %71 : vector<16x128xf32>
    %cst_45 = arith.constant 1.000000e+00 : f32
    %73 = vector.broadcast %cst_45 : f32 to vector<16x128xf32>
    %74 = arith.addf %73, %72 : vector<16x128xf32>
    %75 = arith.divf %73, %74 : vector<16x128xf32>
    %76 = vector.extract_strided_slice %63 {offsets = [0, 256], sizes = [16, 128], strides = [1, 1]} : vector<16x512xf32> to vector<16x128xf32>
    %77 = math.tanh %76 : vector<16x128xf32>
    %78 = vector.extract_strided_slice %63 {offsets = [0, 384], sizes = [16, 128], strides = [1, 1]} : vector<16x512xf32> to vector<16x128xf32>
    %79 = arith.negf %78 : vector<16x128xf32>
    %80 = math.exp %79 : vector<16x128xf32>
    %cst_46 = arith.constant 1.000000e+00 : f32
    %81 = vector.broadcast %cst_46 : f32 to vector<16x128xf32>
    %82 = arith.addf %81, %80 : vector<16x128xf32>
    %83 = arith.divf %81, %82 : vector<16x128xf32>
    %c1_47 = arith.constant 1 : index
    %c0_48 = arith.constant 0 : index
    %c0_49 = arith.constant 0 : index
    %84 = vector.load %arg2[%c1_47, %c0_48, %c0_49] : memref<3x16x128xf32, #tpu.memory_space<vmem>>, vector<1x16x128xf32>
    %85 = vector.shape_cast %84 : vector<1x16x128xf32> to vector<16x128xf32>
    %86 = arith.mulf %75, %85 : vector<16x128xf32>
    %87 = arith.mulf %69, %77 : vector<16x128xf32>
    %88 = arith.addf %86, %87 : vector<16x128xf32>
    %89 = math.tanh %88 : vector<16x128xf32>
    %90 = arith.mulf %83, %89 : vector<16x128xf32>
    %c1_50 = arith.constant 1 : index
    %c0_51 = arith.constant 0 : index
    %c0_52 = arith.constant 0 : index
    %91 = vector.load %arg5[%c1_50, %c0_51, %c0_52] : memref<3x16x128xf32, #tpu.memory_space<vmem>>, vector<1x16x128xf32>
    %92 = vector.shape_cast %91 : vector<1x16x128xf32> to vector<16x128xf32>
    %93 = vector.shape_cast %90 : vector<16x128xf32> to vector<1x16x128xf32>
    tpu.vector_store %arg5[%c1_50, %c0_51, %c0_52], %93 {strides = array<i32>} : memref<3x16x128xf32, #tpu.memory_space<vmem>>, vector<1x16x128xf32>,
    %c1_53 = arith.constant 1 : index
    %c0_54 = arith.constant 0 : index
    %c0_55 = arith.constant 0 : index
    %94 = vector.load %arg6[%c1_53, %c0_54, %c0_55] : memref<3x16x128xf32, #tpu.memory_space<vmem>>, vector<1x16x128xf32>
    %95 = vector.shape_cast %94 : vector<1x16x128xf32> to vector<16x128xf32>
    %96 = vector.shape_cast %88 : vector<16x128xf32> to vector<1x16x128xf32>
    tpu.vector_store %arg6[%c1_53, %c0_54, %c0_55], %96 {strides = array<i32>} : memref<3x16x128xf32, #tpu.memory_space<vmem>>, vector<1x16x128xf32>,
    %97 = arith.truncf %90 : vector<16x128xf32> to vector<16x128xbf16>
    %c0_56 = arith.constant 0 : index
    %c0_57 = arith.constant 0 : index
    %98 = vector.load %arg7[%c0_56, %c0_57] : memref<16x384xbf16, #tpu.memory_space<vmem>>, vector<16x128xbf16>
    tpu.vector_store %arg7[%c0_56, %c0_57], %97 {strides = array<i32>} : memref<16x384xbf16, #tpu.memory_space<vmem>>, vector<16x128xbf16>,
    %c2 = arith.constant 2 : index
    %c0_58 = arith.constant 0 : index
    %c0_59 = arith.constant 0 : index
    %99 = vector.load %arg1[%c2, %c0_58, %c0_59] : memref<3x16x128xf32, #tpu.memory_space<vmem>>, vector<1x16x128xf32>
    %100 = vector.shape_cast %99 : vector<1x16x128xf32> to vector<16x128xf32>
    %101 = arith.truncf %100 : vector<16x128xf32> to vector<16x128xbf16>
    %c0_60 = arith.constant 0 : index
    %c256_61 = arith.constant 256 : index
    %102 = vector.load %arg7[%c0_60, %c256_61] : memref<16x384xbf16, #tpu.memory_space<vmem>>, vector<16x128xbf16>
    tpu.vector_store %arg7[%c0_60, %c256_61], %101 {strides = array<i32>} : memref<16x384xbf16, #tpu.memory_space<vmem>>, vector<16x128xbf16>,
    %c0_62 = arith.constant 0 : index
    %c0_63 = arith.constant 0 : index
    %103 = vector.load %arg7[%c0_62, %c0_63] : memref<16x384xbf16, #tpu.memory_space<vmem>>, vector<16x384xbf16>
    %c2_64 = arith.constant 2 : index
    %c0_65 = arith.constant 0 : index
    %c0_66 = arith.constant 0 : index
    %104 = vector.load %arg3[%c2_64, %c0_65, %c0_66] : memref<3x384x512xbf16, #tpu.memory_space<vmem>>, vector<1x384x512xbf16>
    %105 = vector.shape_cast %104 : vector<1x384x512xbf16> to vector<384x512xbf16>
    %cst_67 = arith.constant dense<0.000000e+00> : vector<16x512xf32>
    %106 = tpu.matmul %103, %105, %cst_67 {dimension_numbers = #tpu.dot_dimension_numbers<[1], [0], [0], [1], [0, 0, 1, 1], [], []>} : vector<16x384xbf16>, vector<384x512xbf16>, vector<16x512xf32> -> vector<16x512xf32>
    %c2_68 = arith.constant 2 : index
    %c0_69 = arith.constant 0 : index
    %c0_70 = arith.constant 0 : index
    %107 = vector.load %arg4[%c2_68, %c0_69, %c0_70] : memref<3x1x512xf32, #tpu.memory_space<vmem>>, vector<1x1x512xf32>
    %108 = vector.shape_cast %107 : vector<1x1x512xf32> to vector<1x512xf32>
    %109 = vector.broadcast %108 : vector<1x512xf32> to vector<16x512xf32>
    %110 = arith.addf %106, %109 : vector<16x512xf32>
    %111 = vector.extract_strided_slice %110 {offsets = [0, 0], sizes = [16, 128], strides = [1, 1]} : vector<16x512xf32> to vector<16x128xf32>
    %112 = arith.negf %111 : vector<16x128xf32>
    %113 = math.exp %112 : vector<16x128xf32>
    %cst_71 = arith.constant 1.000000e+00 : f32
    %114 = vector.broadcast %cst_71 : f32 to vector<16x128xf32>
    %115 = arith.addf %114, %113 : vector<16x128xf32>
    %116 = arith.divf %114, %115 : vector<16x128xf32>
    %117 = vector.extract_strided_slice %110 {offsets = [0, 128], sizes = [16, 128], strides = [1, 1]} : vector<16x512xf32> to vector<16x128xf32>
    %118 = arith.negf %117 : vector<16x128xf32>
    %119 = math.exp %118 : vector<16x128xf32>
    %cst_72 = arith.constant 1.000000e+00 : f32
    %120 = vector.broadcast %cst_72 : f32 to vector<16x128xf32>
    %121 = arith.addf %120, %119 : vector<16x128xf32>
    %122 = arith.divf %120, %121 : vector<16x128xf32>
    %123 = vector.extract_strided_slice %110 {offsets = [0, 256], sizes = [16, 128], strides = [1, 1]} : vector<16x512xf32> to vector<16x128xf32>
    %124 = math.tanh %123 : vector<16x128xf32>
    %125 = vector.extract_strided_slice %110 {offsets = [0, 384], sizes = [16, 128], strides = [1, 1]} : vector<16x512xf32> to vector<16x128xf32>
    %126 = arith.negf %125 : vector<16x128xf32>
    %127 = math.exp %126 : vector<16x128xf32>
    %cst_73 = arith.constant 1.000000e+00 : f32
    %128 = vector.broadcast %cst_73 : f32 to vector<16x128xf32>
    %129 = arith.addf %128, %127 : vector<16x128xf32>
    %130 = arith.divf %128, %129 : vector<16x128xf32>
    %c2_74 = arith.constant 2 : index
    %c0_75 = arith.constant 0 : index
    %c0_76 = arith.constant 0 : index
    %131 = vector.load %arg2[%c2_74, %c0_75, %c0_76] : memref<3x16x128xf32, #tpu.memory_space<vmem>>, vector<1x16x128xf32>
    %132 = vector.shape_cast %131 : vector<1x16x128xf32> to vector<16x128xf32>
    %133 = arith.mulf %122, %132 : vector<16x128xf32>
    %134 = arith.mulf %116, %124 : vector<16x128xf32>
    %135 = arith.addf %133, %134 : vector<16x128xf32>
    %136 = math.tanh %135 : vector<16x128xf32>
    %137 = arith.mulf %130, %136 : vector<16x128xf32>
    %c2_77 = arith.constant 2 : index
    %c0_78 = arith.constant 0 : index
    %c0_79 = arith.constant 0 : index
    %138 = vector.load %arg5[%c2_77, %c0_78, %c0_79] : memref<3x16x128xf32, #tpu.memory_space<vmem>>, vector<1x16x128xf32>
    %139 = vector.shape_cast %138 : vector<1x16x128xf32> to vector<16x128xf32>
    %140 = vector.shape_cast %137 : vector<16x128xf32> to vector<1x16x128xf32>
    tpu.vector_store %arg5[%c2_77, %c0_78, %c0_79], %140 {strides = array<i32>} : memref<3x16x128xf32, #tpu.memory_space<vmem>>, vector<1x16x128xf32>,
    %c2_80 = arith.constant 2 : index
    %c0_81 = arith.constant 0 : index
    %c0_82 = arith.constant 0 : index
    %141 = vector.load %arg6[%c2_80, %c0_81, %c0_82] : memref<3x16x128xf32, #tpu.memory_space<vmem>>, vector<1x16x128xf32>
    %142 = vector.shape_cast %141 : vector<1x16x128xf32> to vector<16x128xf32>
    %143 = vector.shape_cast %135 : vector<16x128xf32> to vector<1x16x128xf32>
    tpu.vector_store %arg6[%c2_80, %c0_81, %c0_82], %143 {strides = array<i32>} : memref<3x16x128xf32, #tpu.memory_space<vmem>>, vector<1x16x128xf32>,
    return
  }
}

</mosaic_0001>

<llo_original>
// kernel: stacked_lstm_forward_fused.1
$region0: #{stacked_lstm_forward_fused.1}
  #allocation0 [shape = 'u32[]', space=smem, size = 0x4, offset = 0x4, fixed_abs, tag = 'smem constant byte address 0x4 - core index']
  #allocation1 [shape = 'u32[144,128]{1,0:T(1,128)}', space=vmem, size = 0x12000, scoped, tag = 'internal scratch']
  #allocation2 [shape = 'bf16[16,384]{1,0:T(8,128)(2,1)}', space=vmem, size = 0x3000, scoped, tag = 'scratch operand']
  %s0 = inlined_call_operand.vmem [shape: f32[16,256], index: 0, kind: input, shape index: {}]
  %s1 = inlined_call_operand.vmem [shape: f32[3,16,128], index: 1, kind: input, shape index: {}, may-alias: {1,5}]
  %s2 = inlined_call_operand.vmem [shape: f32[3,16,128], index: 2, kind: input, shape index: {}, may-alias: {2,6}]
  %s3 = inlined_call_operand.hbm [shape: bf16[3,384,512], index: 3, kind: input, shape index: {}]
  %s4 = inlined_call_operand.hbm [shape: f32[3,1,512], index: 4, kind: input, shape index: {}]
  %s5 = inlined_call_operand.vmem [shape: f32[3,16,128], index: 5, kind: output, shape index: {0}, may-alias: {1,5}]
  %s6 = inlined_call_operand.vmem [shape: f32[3,16,128], index: 6, kind: output, shape index: {1}, may-alias: {2,6}]
  %7 = xla_tuple %s5, %s6
  %s8 = sld [smem:[#allocation0]]
  $region46: #{stacked_lstm_forward_fused.1} parent=0
    _
  %s10 = ssub.s32 1, %s8
  %s11 = scalar_select 0, %s10, %s8
  $region1: #{stacked_lstm_forward_fused.1} parent=0
    #allocation3 [shape = 'u8[1179648]{0}', space=vmem, size = 0x120000, scoped, tag = 'input window, operand 3, single buffered']
    #allocation4 [shape = 's32[1]{0}', space=sflag, size = 0x4, scoped, tag = 'scoped memory for stacked_lstm_forward_fused.1']
    #allocation5 [shape = 'u8[6144]{0}', space=vmem, size = 0x1800, scoped, tag = 'input window, operand 4, single buffered']
    #allocation6 [shape = 's32[1]{0}', space=sflag, size = 0x4, scoped, tag = 'scoped memory for stacked_lstm_forward_fused.1']
    %12 = vsyncpa [#allocation4], 0
    %13 = vsyncpa [#allocation6], 0
    // Predicated region
    $region2: #{stacked_lstm_forward_fused.1} parent=1 // pred_check
      _
    $region3: #{stacked_lstm_forward_fused.1} parent=1 // pred_check_branch
      %15 = sbr.rel (0) target = $region5
    $region4: #{stacked_lstm_forward_fused.1} parent=1 // pred_region
      _
    $region5: #{stacked_lstm_forward_fused.1} parent=1 // pred_fallthru
      _
    // Predicated region
    $region6: #{stacked_lstm_forward_fused.1} parent=1 // pred_check
      _
    $region7: #{stacked_lstm_forward_fused.1} parent=1 // pred_check_branch
      %17 = sbr.rel (0) target = $region9
    $region8: #{stacked_lstm_forward_fused.1} parent=1 // pred_region
      _
    $region9: #{stacked_lstm_forward_fused.1} parent=1 // pred_fallthru
      _
    // Predicated region
    $region10: #{stacked_lstm_forward_fused.1} parent=1 // pred_check
      _
    $region11: #{stacked_lstm_forward_fused.1} parent=1 // pred_check_branch
      %19 = sbr.rel (0) target = $region13
    $region12: #{stacked_lstm_forward_fused.1} parent=1 // pred_region
      _
    $region13: #{stacked_lstm_forward_fused.1} parent=1 // pred_fallthru
      _
    // Predicated region
    $region14: #{stacked_lstm_forward_fused.1} parent=1 // pred_check
      _
    $region15: #{stacked_lstm_forward_fused.1} parent=1 // pred_check_branch
      %21 = sbr.rel (0) target = $region17
    $region16: #{stacked_lstm_forward_fused.1} parent=1 // pred_region
      %s23 = ssub.s32 36864, 36864
      %24 = vsyncadd [#allocation4], %s23
      %s25 = sshll.u32 [#allocation3], 4
      %s26 = int_to_ptr.vmem [resolvable:$true] %s25
      %31 = dma.hbm_to_vmem [thread:$0]  %s3, 36864, %s26, [#allocation4], 256, 256, 16
    $region17: #{stacked_lstm_forward_fused.1} parent=1 // pred_fallthru
      _
    // Predicated region
    $region18: #{stacked_lstm_forward_fused.1} parent=1 // pred_check
      _
    $region19: #{stacked_lstm_forward_fused.1} parent=1 // pred_check_branch
      %33 = sbr.rel (0) target = $region21
    $region20: #{stacked_lstm_forward_fused.1} parent=1 // pred_region
      %s35 = ssub.s32 192, 192
      %36 = vsyncadd [#allocation6], %s35
      %s37 = sshll.u32 [#allocation5], 4
      %s38 = int_to_ptr.vmem [resolvable:$true] %s37
      %43 = dma.hbm_to_vmem [thread:$0]  %s4, 192, %s38, [#allocation6], 64, 64, 4
    $region21: #{stacked_lstm_forward_fused.1} parent=1 // pred_fallthru
      _
    // Predicated region
    $region22: #{stacked_lstm_forward_fused.1} parent=1 // pred_check
      _
    $region23: #{stacked_lstm_forward_fused.1} parent=1 // pred_check_branch
      %45 = sbr.rel (0) target = $region25
    $region24: #{stacked_lstm_forward_fused.1} parent=1 // pred_region
      %46 = dma.done [#allocation4], 36864
    $region25: #{stacked_lstm_forward_fused.1} parent=1 // pred_fallthru
      _
    // Predicated region
    $region26: #{stacked_lstm_forward_fused.1} parent=1 // pred_check
      _
    $region27: #{stacked_lstm_forward_fused.1} parent=1 // pred_check_branch
      %48 = sbr.rel (0) target = $region29
    $region28: #{stacked_lstm_forward_fused.1} parent=1 // pred_region
      %49 = dma.done [#allocation6], 192
    $region29: #{stacked_lstm_forward_fused.1} parent=1 // pred_fallthru
      _
    %v51 = vld [vmem:[%s0] sm:$0xff]
    %v52 = vld [vmem:[%s0 + $0x8] sm:$0xff]
    %v53 = vld [vmem:[%s0 + $0x10] sm:$0xff]
    %v54 = vld [vmem:[%s0 + $0x18] sm:$0xff]
    %v55 = vpack.c.bf16 %v53, %v51
    %v56 = vpack.c.bf16 %v54, %v52
    %v59 = vunpack.c.l.b16 %v55
    %v60 = vunpack.c.l.b16 %v56
    %v61 = vunpack.c.h.b16 %v55
    %v62 = vunpack.c.h.b16 %v56
    %v63 = vpack.c.b16 %v60, %v59
    %v64 = vpack.c.b16 %v62, %v61
    %67 = vst [vmem:[#allocation2] sm:$0xff] %v63
    %68 = vst [vmem:[#allocation2 + $0xc] sm:$0xff] %v64
    %v69 = vld [vmem:[%s1] sm:$0xff]
    %v70 = vld [vmem:[%s1 + $0x8] sm:$0xff]
    %v71 = vpack.c.bf16 %v70, %v69
    %v73 = vunpack.c.l.b16 %v71
    %v74 = vunpack.c.h.b16 %v71
    %v75 = vpack.c.b16 %v73, %v73
    %v76 = vpack.c.b16 %v74, %v74
    %79 = vst [vmem:[#allocation2 + $0x8] sm:$0xf] %v75
    %80 = vst [vmem:[#allocation2 + $0x14] sm:$0xf] %v76
    %v81 = vld [vmem:[#allocation2] sm:$0xff]
    %v82 = vld [vmem:[#allocation2 + $0x8] sm:$0xf]
    %v83 = vld [vmem:[#allocation2 + $0xc] sm:$0xff]
    %v84 = vld [vmem:[#allocation2 + $0x14] sm:$0xf]
    %v85 = vld [vmem:[#allocation3] sm:$0xff]
    %v86 = vld [vmem:[#allocation3 + $0x8] sm:$0xff]
    %v87 = vld [vmem:[#allocation3 + $0x10] sm:$0xff]
    %v88 = vld [vmem:[#allocation3 + $0x18] sm:$0xff]
    %v89 = vld [vmem:[#allocation3 + $0x20] sm:$0xff]
    %v90 = vld [vmem:[#allocation3 + $0x28] sm:$0xff]
    %v91 = vld [vmem:[#allocation3 + $0x30] sm:$0xff]
    %v92 = vld [vmem:[#allocation3 + $0x38] sm:$0xff]
    %v93 = vld [vmem:[#allocation3 + $0x40] sm:$0xff]
    %v94 = vld [vmem:[#allocation3 + $0x48] sm:$0xff]
    %v95 = vld [vmem:[#allocation3 + $0x50] sm:$0xff]
    %v96 = vld [vmem:[#allocation3 + $0x58] sm:$0xff]
    %v97 = vld [vmem:[#allocation3 + $0x60] sm:$0xff]
    %v98 = vld [vmem:[#allocation3 + $0x68] sm:$0xff]
    %v99 = vld [vmem:[#allocation3 + $0x70] sm:$0xff]
    %v100 = vld [vmem:[#allocation3 + $0x78] sm:$0xff]
    %v101 = vld [vmem:[#allocation3 + $0x80] sm:$0xff]
    %v102 = vld [vmem:[#allocation3 + $0x88] sm:$0xff]
    %v103 = vld [vmem:[#allocation3 + $0x90] sm:$0xff]
    %v104 = vld [vmem:[#allocation3 + $0x98] sm:$0xff]
    %v105 = vld [vmem:[#allocation3 + $0xa0] sm:$0xff]
    %v106 = vld [vmem:[#allocation3 + $0xa8] sm:$0xff]
    %v107 = vld [vmem:[#allocation3 + $0xb0] sm:$0xff]
    %v108 = vld [vmem:[#allocation3 + $0xb8] sm:$0xff]
    %v109 = vld [vmem:[#allocation3 + $0xc0] sm:$0xff]
    %v110 = vld [vmem:[#allocation3 + $0xc8] sm:$0xff]
    %v111 = vld [vmem:[#allocation3 + $0xd0] sm:$0xff]
    %v112 = vld [vmem:[#allocation3 + $0xd8] sm:$0xff]
    %v113 = vld [vmem:[#allocation3 + $0xe0] sm:$0xff]
    %v114 = vld [vmem:[#allocation3 + $0xe8] sm:$0xff]
    %v115 = vld [vmem:[#allocation3 + $0xf0] sm:$0xff]
    %v116 = vld [vmem:[#allocation3 + $0xf8] sm:$0xff]
    %v117 = vld [vmem:[#allocation3 + $0x100] sm:$0xff]
    %v118 = vld [vmem:[#allocation3 + $0x108] sm:$0xff]
    %v119 = vld [vmem:[#allocation3 + $0x110] sm:$0xff]
    %v120 = vld [vmem:[#allocation3 + $0x118] sm:$0xff]
    %v121 = vld [vmem:[#allocation3 + $0x120] sm:$0xff]
    %v122 = vld [vmem:[#allocation3 + $0x128] sm:$0xff]
    %v123 = vld [vmem:[#allocation3 + $0x130] sm:$0xff]
    %v124 = vld [vmem:[#allocation3 + $0x138] sm:$0xff]
    %v125 = vld [vmem:[#allocation3 + $0x140] sm:$0xff]
    %v126 = vld [vmem:[#allocation3 + $0x148] sm:$0xff]
    %v127 = vld [vmem:[#allocation3 + $0x150] sm:$0xff]
    %v128 = vld [vmem:[#allocation3 + $0x158] sm:$0xff]
    %v129 = vld [vmem:[#allocation3 + $0x160] sm:$0xff]
    %v130 = vld [vmem:[#allocation3 + $0x168] sm:$0xff]
    %v131 = vld [vmem:[#allocation3 + $0x170] sm:$0xff]
    %v132 = vld [vmem:[#allocation3 + $0x178] sm:$0xff]
    %v133 = vld [vmem:[#allocation3 + $0x180] sm:$0xff]
    %v134 = vld [vmem:[#allocation3 + $0x188] sm:$0xff]
    %v135 = vld [vmem:[#allocation3 + $0x190] sm:$0xff]
    %v136 = vld [vmem:[#allocation3 + $0x198] sm:$0xff]
    %v137 = vld [vmem:[#allocation3 + $0x1a0] sm:$0xff]
    %v138 = vld [vmem:[#allocation3 + $0x1a8] sm:$0xff]
    %v139 = vld [vmem:[#allocation3 + $0x1b0] sm:$0xff]
    %v140 = vld [vmem:[#allocation3 + $0x1b8] sm:$0xff]
    %v141 = vld [vmem:[#allocation3 + $0x1c0] sm:$0xff]
    %v142 = vld [vmem:[#allocation3 + $0x1c8] sm:$0xff]
    %v143 = vld [vmem:[#allocation3 + $0x1d0] sm:$0xff]
    %v144 = vld [vmem:[#allocation3 + $0x1d8] sm:$0xff]
    %v145 = vld [vmem:[#allocation3 + $0x1e0] sm:$0xff]
    %v146 = vld [vmem:[#allocation3 + $0x1e8] sm:$0xff]
    %v147 = vld [vmem:[#allocation3 + $0x1f0] sm:$0xff]
    %v148 = vld [vmem:[#allocation3 + $0x1f8] sm:$0xff]
    %v149 = vld [vmem:[#allocation3 + $0x200] sm:$0xff]
    %v150 = vld [vmem:[#allocation3 + $0x208] sm:$0xff]
    %v151 = vld [vmem:[#allocation3 + $0x210] sm:$0xff]
    %v152 = vld [vmem:[#allocation3 + $0x218] sm:$0xff]
    %v153 = vld [vmem:[#allocation3 + $0x220] sm:$0xff]
    %v154 = vld [vmem:[#allocation3 + $0x228] sm:$0xff]
    %v155 = vld [vmem:[#allocation3 + $0x230] sm:$0xff]
    %v156 = vld [vmem:[#allocation3 + $0x238] sm:$0xff]
    %v157 = vld [vmem:[#allocation3 + $0x240] sm:$0xff]
    %v158 = vld [vmem:[#allocation3 + $0x248] sm:$0xff]
    %v159 = vld [vmem:[#allocation3 + $0x250] sm:$0xff]
    %v160 = vld [vmem:[#allocation3 + $0x258] sm:$0xff]
    %v161 = vld [vmem:[#allocation3 + $0x260] sm:$0xff]
    %v162 = vld [vmem:[#allocation3 + $0x268] sm:$0xff]
    %v163 = vld [vmem:[#allocation3 + $0x270] sm:$0xff]
    %v164 = vld [vmem:[#allocation3 + $0x278] sm:$0xff]
    %v165 = vld [vmem:[#allocation3 + $0x280] sm:$0xff]
    %v166 = vld [vmem:[#allocation3 + $0x288] sm:$0xff]
    %v167 = vld [vmem:[#allocation3 + $0x290] sm:$0xff]
    %v168 = vld [vmem:[#allocation3 + $0x298] sm:$0xff]
    %v169 = vld [vmem:[#allocation3 + $0x2a0] sm:$0xff]
    %v170 = vld [vmem:[#allocation3 + $0x2a8] sm:$0xff]
    %v171 = vld [vmem:[#allocation3 + $0x2b0] sm:$0xff]
    %v172 = vld [vmem:[#allocation3 + $0x2b8] sm:$0xff]
    %v173 = vld [vmem:[#allocation3 + $0x2c0] sm:$0xff]
    %v174 = vld [vmem:[#allocation3 + $0x2c8] sm:$0xff]
    %v175 = vld [vmem:[#allocation3 + $0x2d0] sm:$0xff]
    %v176 = vld [vmem:[#allocation3 + $0x2d8] sm:$0xff]
    %v177 = vld [vmem:[#allocation3 + $0x2e0] sm:$0xff]
    %v178 = vld [vmem:[#allocation3 + $0x2e8] sm:$0xff]
    %v179 = vld [vmem:[#allocation3 + $0x2f0] sm:$0xff]
    %v180 = vld [vmem:[#allocation3 + $0x2f8] sm:$0xff]
    %v181 = vld [vmem:[#allocation5] sm:$0xf]
    %v183 = vlaneseq
    %v184 = vshrl.u32 %v183, 7
    %v185 = vsub.s32 0, %v184
    %v186 = vrot.slane %v181, %v185
    %v187 = vlaneseq
    %v188 = vshrl.u32 %v187, 7
    %v189 = vsub.s32 1, %v188
    %v190 = vrot.slane %v181, %v189
    %v191 = vlaneseq
    %v192 = vshrl.u32 %v191, 7
    %v193 = vsub.s32 2, %v192
    %v194 = vrot.slane %v181, %v193
    %v195 = vlaneseq
    %v196 = vshrl.u32 %v195, 7
    %v197 = vsub.s32 3, %v196
    %v198 = vrot.slane %v181, %v197
    %v207 = vunpack.c.l.b16 %v81
    %v208 = vunpack.c.h.b16 %v81
    %v209 = vunpack.c.l.b16 %v82
    %v210 = vunpack.c.l.b16 %v83
    %v211 = vunpack.c.h.b16 %v83
    %v212 = vunpack.c.l.b16 %v84
    %v213 = vpack.c.b16 %v210, %v207
    %v214 = vpack.c.b16 %v211, %v208
    %v215 = vpack.c.b16 %v212, %v209
    %v315 = vunpack.c.l.b16 %v85
    %v316 = vunpack.c.h.b16 %v85
    %v317 = vunpack.c.l.b16 %v86
    %v318 = vunpack.c.h.b16 %v86
    %v319 = vunpack.c.l.b16 %v87
    %v320 = vunpack.c.h.b16 %v87
    %v321 = vunpack.c.l.b16 %v88
    %v322 = vunpack.c.h.b16 %v88
    %v323 = vunpack.c.l.b16 %v89
    %v324 = vunpack.c.h.b16 %v89
    %v325 = vunpack.c.l.b16 %v90
    %v326 = vunpack.c.h.b16 %v90
    %v327 = vunpack.c.l.b16 %v91
    %v328 = vunpack.c.h.b16 %v91
    %v329 = vunpack.c.l.b16 %v92
    %v330 = vunpack.c.h.b16 %v92
    %v331 = vunpack.c.l.b16 %v93
    %v332 = vunpack.c.h.b16 %v93
    %v333 = vunpack.c.l.b16 %v94
    %v334 = vunpack.c.h.b16 %v94
    %v335 = vunpack.c.l.b16 %v95
    %v336 = vunpack.c.h.b16 %v95
    %v337 = vunpack.c.l.b16 %v96
    %v338 = vunpack.c.h.b16 %v96
    %v339 = vunpack.c.l.b16 %v97
    %v340 = vunpack.c.h.b16 %v97
    %v341 = vunpack.c.l.b16 %v98
    %v342 = vunpack.c.h.b16 %v98
    %v343 = vunpack.c.l.b16 %v99
    %v344 = vunpack.c.h.b16 %v99
    %v345 = vunpack.c.l.b16 %v100
    %v346 = vunpack.c.h.b16 %v100
    %v347 = vunpack.c.l.b16 %v101
    %v348 = vunpack.c.h.b16 %v101
    %v349 = vunpack.c.l.b16 %v102
    %v350 = vunpack.c.h.b16 %v102
    %v351 = vunpack.c.l.b16 %v103
    %v352 = vunpack.c.h.b16 %v103
    %v353 = vunpack.c.l.b16 %v104
    %v354 = vunpack.c.h.b16 %v104
    %v355 = vunpack.c.l.b16 %v105
    %v356 = vunpack.c.h.b16 %v105
    %v357 = vunpack.c.l.b16 %v106
    %v358 = vunpack.c.h.b16 %v106
    %v359 = vunpack.c.l.b16 %v107
    %v360 = vunpack.c.h.b16 %v107
    %v361 = vunpack.c.l.b16 %v108
    %v362 = vunpack.c.h.b16 %v108
    %v363 = vunpack.c.l.b16 %v109
    %v364 = vunpack.c.h.b16 %v109
    %v365 = vunpack.c.l.b16 %v110
    %v366 = vunpack.c.h.b16 %v110
    %v367 = vunpack.c.l.b16 %v111
    %v368 = vunpack.c.h.b16 %v111
    %v369 = vunpack.c.l.b16 %v112
    %v370 = vunpack.c.h.b16 %v112
    %v371 = vunpack.c.l.b16 %v113
    %v372 = vunpack.c.h.b16 %v113
    %v373 = vunpack.c.l.b16 %v114
    %v374 = vunpack.c.h.b16 %v114
    %v375 = vunpack.c.l.b16 %v115
    %v376 = vunpack.c.h.b16 %v115
    %v377 = vunpack.c.l.b16 %v116
    %v378 = vunpack.c.h.b16 %v116
    %v379 = vunpack.c.l.b16 %v117
    %v380 = vunpack.c.h.b16 %v117
    %v381 = vunpack.c.l.b16 %v118
    %v382 = vunpack.c.h.b16 %v118
    %v383 = vunpack.c.l.b16 %v119
    %v384 = vunpack.c.h.b16 %v119
    %v385 = vunpack.c.l.b16 %v120
    %v386 = vunpack.c.h.b16 %v120
    %v387 = vunpack.c.l.b16 %v121
    %v388 = vunpack.c.h.b16 %v121
    %v389 = vunpack.c.l.b16 %v122
    %v390 = vunpack.c.h.b16 %v122
    %v391 = vunpack.c.l.b16 %v123
    %v392 = vunpack.c.h.b16 %v123
    %v393 = vunpack.c.l.b16 %v124
    %v394 = vunpack.c.h.b16 %v124
    %v395 = vunpack.c.l.b16 %v125
    %v396 = vunpack.c.h.b16 %v125
    %v397 = vunpack.c.l.b16 %v126
    %v398 = vunpack.c.h.b16 %v126
    %v399 = vunpack.c.l.b16 %v127
    %v400 = vunpack.c.h.b16 %v127
    %v401 = vunpack.c.l.b16 %v128
    %v402 = vunpack.c.h.b16 %v128
    %v403 = vunpack.c.l.b16 %v129
    %v404 = vunpack.c.h.b16 %v129
    %v405 = vunpack.c.l.b16 %v130
    %v406 = vunpack.c.h.b16 %v130
    %v407 = vunpack.c.l.b16 %v131
    %v408 = vunpack.c.h.b16 %v131
    %v409 = vunpack.c.l.b16 %v132
    %v410 = vunpack.c.h.b16 %v132
    %v411 = vunpack.c.l.b16 %v133
    %v412 = vunpack.c.h.b16 %v133
    %v413 = vunpack.c.l.b16 %v134
    %v414 = vunpack.c.h.b16 %v134
    %v415 = vunpack.c.l.b16 %v135
    %v416 = vunpack.c.h.b16 %v135
    %v417 = vunpack.c.l.b16 %v136
    %v418 = vunpack.c.h.b16 %v136
    %v419 = vunpack.c.l.b16 %v137
    %v420 = vunpack.c.h.b16 %v137
    %v421 = vunpack.c.l.b16 %v138
    %v422 = vunpack.c.h.b16 %v138
    %v423 = vunpack.c.l.b16 %v139
    %v424 = vunpack.c.h.b16 %v139
    %v425 = vunpack.c.l.b16 %v140
    %v426 = vunpack.c.h.b16 %v140
    %v427 = vunpack.c.l.b16 %v141
    %v428 = vunpack.c.h.b16 %v141
    %v429 = vunpack.c.l.b16 %v142
    %v430 = vunpack.c.h.b16 %v142
    %v431 = vunpack.c.l.b16 %v143
    %v432 = vunpack.c.h.b16 %v143
    %v433 = vunpack.c.l.b16 %v144
    %v434 = vunpack.c.h.b16 %v144
    %v435 = vunpack.c.l.b16 %v145
    %v436 = vunpack.c.h.b16 %v145
    %v437 = vunpack.c.l.b16 %v146
    %v438 = vunpack.c.h.b16 %v146
    %v439 = vunpack.c.l.b16 %v147
    %v440 = vunpack.c.h.b16 %v147
    %v441 = vunpack.c.l.b16 %v148
    %v442 = vunpack.c.h.b16 %v148
    %v443 = vunpack.c.l.b16 %v149
    %v444 = vunpack.c.h.b16 %v149
    %v445 = vunpack.c.l.b16 %v150
    %v446 = vunpack.c.h.b16 %v150
    %v447 = vunpack.c.l.b16 %v151
    %v448 = vunpack.c.h.b16 %v151
    %v449 = vunpack.c.l.b16 %v152
    %v450 = vunpack.c.h.b16 %v152
    %v451 = vunpack.c.l.b16 %v153
    %v452 = vunpack.c.h.b16 %v153
    %v453 = vunpack.c.l.b16 %v154
    %v454 = vunpack.c.h.b16 %v154
    %v455 = vunpack.c.l.b16 %v155
    %v456 = vunpack.c.h.b16 %v155
    %v457 = vunpack.c.l.b16 %v156
    %v458 = vunpack.c.h.b16 %v156
    %v459 = vunpack.c.l.b16 %v157
    %v460 = vunpack.c.h.b16 %v157
    %v461 = vunpack.c.l.b16 %v158
    %v462 = vunpack.c.h.b16 %v158
    %v463 = vunpack.c.l.b16 %v159
    %v464 = vunpack.c.h.b16 %v159
    %v465 = vunpack.c.l.b16 %v160
    %v466 = vunpack.c.h.b16 %v160
    %v467 = vunpack.c.l.b16 %v161
    %v468 = vunpack.c.h.b16 %v161
    %v469 = vunpack.c.l.b16 %v162
    %v470 = vunpack.c.h.b16 %v162
    %v471 = vunpack.c.l.b16 %v163
    %v472 = vunpack.c.h.b16 %v163
    %v473 = vunpack.c.l.b16 %v164
    %v474 = vunpack.c.h.b16 %v164
    %v475 = vunpack.c.l.b16 %v165
    %v476 = vunpack.c.h.b16 %v165
    %v477 = vunpack.c.l.b16 %v166
    %v478 = vunpack.c.h.b16 %v166
    %v479 = vunpack.c.l.b16 %v167
    %v480 = vunpack.c.h.b16 %v167
    %v481 = vunpack.c.l.b16 %v168
    %v482 = vunpack.c.h.b16 %v168
    %v483 = vunpack.c.l.b16 %v169
    %v484 = vunpack.c.h.b16 %v169
    %v485 = vunpack.c.l.b16 %v170
    %v486 = vunpack.c.h.b16 %v170
    %v487 = vunpack.c.l.b16 %v171
    %v488 = vunpack.c.h.b16 %v171
    %v489 = vunpack.c.l.b16 %v172
    %v490 = vunpack.c.h.b16 %v172
    %v491 = vunpack.c.l.b16 %v173
    %v492 = vunpack.c.h.b16 %v173
    %v493 = vunpack.c.l.b16 %v174
    %v494 = vunpack.c.h.b16 %v174
    %v495 = vunpack.c.l.b16 %v175
    %v496 = vunpack.c.h.b16 %v175
    %v497 = vunpack.c.l.b16 %v176
    %v498 = vunpack.c.h.b16 %v176
    %v499 = vunpack.c.l.b16 %v177
    %v500 = vunpack.c.h.b16 %v177
    %v501 = vunpack.c.l.b16 %v178
    %v502 = vunpack.c.h.b16 %v178
    %v503 = vunpack.c.l.b16 %v179
    %v504 = vunpack.c.h.b16 %v179
    %v505 = vunpack.c.l.b16 %v180
    %v506 = vunpack.c.h.b16 %v180
    %v507 = vpack.c.b16 %v319, %v315
    %v508 = vpack.c.b16 %v320, %v316
    %v509 = vpack.c.b16 %v321, %v317
    %v510 = vpack.c.b16 %v322, %v318
    %v511 = vpack.c.b16 %v327, %v323
    %v512 = vpack.c.b16 %v328, %v324
    %v513 = vpack.c.b16 %v329, %v325
    %v514 = vpack.c.b16 %v330, %v326
    %v515 = vpack.c.b16 %v335, %v331
    %v516 = vpack.c.b16 %v336, %v332
    %v517 = vpack.c.b16 %v337, %v333
    %v518 = vpack.c.b16 %v338, %v334
    %v519 = vpack.c.b16 %v343, %v339
    %v520 = vpack.c.b16 %v344, %v340
    %v521 = vpack.c.b16 %v345, %v341
    %v522 = vpack.c.b16 %v346, %v342
    %v523 = vpack.c.b16 %v351, %v347
    %v524 = vpack.c.b16 %v352, %v348
    %v525 = vpack.c.b16 %v353, %v349
    %v526 = vpack.c.b16 %v354, %v350
    %v527 = vpack.c.b16 %v359, %v355
    %v528 = vpack.c.b16 %v360, %v356
    %v529 = vpack.c.b16 %v361, %v357
    %v530 = vpack.c.b16 %v362, %v358
    %v531 = vpack.c.b16 %v367, %v363
    %v532 = vpack.c.b16 %v368, %v364
    %v533 = vpack.c.b16 %v369, %v365
    %v534 = vpack.c.b16 %v370, %v366
    %v535 = vpack.c.b16 %v375, %v371
    %v536 = vpack.c.b16 %v376, %v372
    %v537 = vpack.c.b16 %v377, %v373
    %v538 = vpack.c.b16 %v378, %v374
    %v539 = vpack.c.b16 %v383, %v379
    %v540 = vpack.c.b16 %v384, %v380
    %v541 = vpack.c.b16 %v385, %v381
    %v542 = vpack.c.b16 %v386, %v382
    %v543 = vpack.c.b16 %v391, %v387
    %v544 = vpack.c.b16 %v392, %v388
    %v545 = vpack.c.b16 %v393, %v389
    %v546 = vpack.c.b16 %v394, %v390
    %v547 = vpack.c.b16 %v399, %v395
    %v548 = vpack.c.b16 %v400, %v396
    %v549 = vpack.c.b16 %v401, %v397
    %v550 = vpack.c.b16 %v402, %v398
    %v551 = vpack.c.b16 %v407, %v403
    %v552 = vpack.c.b16 %v408, %v404
    %v553 = vpack.c.b16 %v409, %v405
    %v554 = vpack.c.b16 %v410, %v406
    %v555 = vpack.c.b16 %v415, %v411
    %v556 = vpack.c.b16 %v416, %v412
    %v557 = vpack.c.b16 %v417, %v413
    %v558 = vpack.c.b16 %v418, %v414
    %v559 = vpack.c.b16 %v423, %v419
    %v560 = vpack.c.b16 %v424, %v420
    %v561 = vpack.c.b16 %v425, %v421
    %v562 = vpack.c.b16 %v426, %v422
    %v563 = vpack.c.b16 %v431, %v427
    %v564 = vpack.c.b16 %v432, %v428
    %v565 = vpack.c.b16 %v433, %v429
    %v566 = vpack.c.b16 %v434, %v430
    %v567 = vpack.c.b16 %v439, %v435
    %v568 = vpack.c.b16 %v440, %v436
    %v569 = vpack.c.b16 %v441, %v437
    %v570 = vpack.c.b16 %v442, %v438
    %v571 = vpack.c.b16 %v447, %v443
    %v572 = vpack.c.b16 %v448, %v444
    %v573 = vpack.c.b16 %v449, %v445
    %v574 = vpack.c.b16 %v450, %v446
    %v575 = vpack.c.b16 %v455, %v451
    %v576 = vpack.c.b16 %v456, %v452
    %v577 = vpack.c.b16 %v457, %v453
    %v578 = vpack.c.b16 %v458, %v454
    %v579 = vpack.c.b16 %v463, %v459
    %v580 = vpack.c.b16 %v464, %v460
    %v581 = vpack.c.b16 %v465, %v461
    %v582 = vpack.c.b16 %v466, %v462
    %v583 = vpack.c.b16 %v471, %v467
    %v584 = vpack.c.b16 %v472, %v468
    %v585 = vpack.c.b16 %v473, %v469
    %v586 = vpack.c.b16 %v474, %v470
    %v587 = vpack.c.b16 %v479, %v475
    %v588 = vpack.c.b16 %v480, %v476
    %v589 = vpack.c.b16 %v481, %v477
    %v590 = vpack.c.b16 %v482, %v478
    %v591 = vpack.c.b16 %v487, %v483
    %v592 = vpack.c.b16 %v488, %v484
    %v593 = vpack.c.b16 %v489, %v485
    %v594 = vpack.c.b16 %v490, %v486
    %v595 = vpack.c.b16 %v495, %v491
    %v596 = vpack.c.b16 %v496, %v492
    %v597 = vpack.c.b16 %v497, %v493
    %v598 = vpack.c.b16 %v498, %v494
    %v599 = vpack.c.b16 %v503, %v499
    %v600 = vpack.c.b16 %v504, %v500
    %v601 = vpack.c.b16 %v505, %v501
    %v602 = vpack.c.b16 %v506, %v502
    %699 = vmatprep.subr.bf16.mxu0 %v536
    %700 = vmatpush1.bf16.msra.mxu0 %v535
    %701 = vmatprep.subr.bf16.mxu0 %v532
    %702 = vmatpush1.bf16.msra.mxu0 %v531
    %703 = vmatprep.subr.bf16.mxu0 %v528
    %704 = vmatpush1.bf16.msra.mxu0 %v527
    %705 = vmatprep.subr.bf16.mxu0 %v524
    %706 = vmatpush1.bf16.msra.mxu0 %v523
    %707 = vmatprep.subr.bf16.mxu0 %v520
    %708 = vmatpush1.bf16.msra.mxu0 %v519
    %709 = vmatprep.subr.bf16.mxu0 %v516
    %710 = vmatpush1.bf16.msra.mxu0 %v515
    %711 = vmatprep.subr.bf16.mxu0 %v512
    %712 = vmatpush1.bf16.msra.mxu0 %v511
    %713 = vmatprep.subr.bf16.mxu0 %v508
    %714 = vmatpush1.bf16.msra.mxu0 %v507
    %715 = vmatprep.subr.bf16.mxu0 %v568
    %716 = vmatpush2.bf16.msra.mxu0 %v567
    %717 = vmatprep.subr.bf16.mxu0 %v564
    %718 = vmatpush2.bf16.msra.mxu0 %v563
    %719 = vmatprep.subr.bf16.mxu0 %v560
    %720 = vmatpush2.bf16.msra.mxu0 %v559
    %721 = vmatprep.subr.bf16.mxu0 %v556
    %722 = vmatpush2.bf16.msra.mxu0 %v555
    %723 = vmatprep.subr.bf16.mxu0 %v552
    %724 = vmatpush2.bf16.msra.mxu0 %v551
    %725 = vmatprep.subr.bf16.mxu0 %v548
    %726 = vmatpush2.bf16.msra.mxu0 %v547
    %727 = vmatprep.subr.bf16.mxu0 %v544
    %728 = vmatpush2.bf16.msra.mxu0 %v543
    %729 = vmatprep.subr.bf16.mxu0 %v540
    %730 = vmatpush2.bf16.msra.mxu0 %v539
    %731 = vmatprep.mubr.bf16.mxu0 %v214
    %732 = vmatmul.mubr.bf16.gmra.mxu0 %v213
    %v733 = vpop.f32.mrf.mxu0
    %v734 = vadd.f32 %v186, %v733
    %v735 = vpop.f32.mrf.mxu0
    %v736 = vadd.f32 %v190, %v735
    %v737 = vpop.f32.mrf.mxu0
    %v738 = vadd.f32 %v186, %v737
    %v739 = vpop.f32.mrf.mxu0
    %v740 = vadd.f32 %v190, %v739
    %741 = vdwg.mxu0
    %742 = vmatprep.subr.bf16.mxu0 %v600
    %743 = vmatpush1.bf16.msra.mxu0 %v599
    %744 = vmatprep.subr.bf16.mxu0 %v596
    %745 = vmatpush1.bf16.msra.mxu0 %v595
    %746 = vmatprep.subr.bf16.mxu0 %v592
    %747 = vmatpush1.bf16.msra.mxu0 %v591
    %748 = vmatprep.subr.bf16.mxu0 %v588
    %749 = vmatpush1.bf16.msra.mxu0 %v587
    %750 = vmatprep.subr.bf16.mxu0 %v584
    %751 = vmatpush1.bf16.msra.mxu0 %v583
    %752 = vmatprep.subr.bf16.mxu0 %v580
    %753 = vmatpush1.bf16.msra.mxu0 %v579
    %754 = vmatprep.subr.bf16.mxu0 %v576
    %755 = vmatpush1.bf16.msra.mxu0 %v575
    %756 = vmatprep.subr.bf16.mxu0 %v572
    %757 = vmatpush1.bf16.msra.mxu0 %v571
    %758 = vmatprep.subr.bf16.mxu0 0
    %759 = vmatpush2.bf16.msra.mxu0 0
    %760 = vmatprep.subr.bf16.mxu0 0
    %761 = vmatpush2.bf16.msra.mxu0 0
    %762 = vmatprep.subr.bf16.mxu0 0
    %763 = vmatpush2.bf16.msra.mxu0 0
    %764 = vmatprep.subr.bf16.mxu0 0
    %765 = vmatpush2.bf16.msra.mxu0 0
    %766 = vmatprep.subr.bf16.mxu0 0
    %767 = vmatpush2.bf16.msra.mxu0 0
    %768 = vmatprep.subr.bf16.mxu0 0
    %769 = vmatpush2.bf16.msra.mxu0 0
    %770 = vmatprep.subr.bf16.mxu0 0
    %771 = vmatpush2.bf16.msra.mxu0 0
    %772 = vmatprep.subr.bf16.mxu0 0
    %773 = vmatpush2.bf16.msra.mxu0 0
    %774 = vmatprep.mubr.bf16.mxu0 0
    %775 = vmatmul.mubr.bf16.gmra.mxu0 %v215
    %v776 = vpop.f32.mrf.mxu0
    %v777 = vadd.f32 %v734, %v776
    %v778 = vpop.f32.mrf.mxu0
    %v779 = vadd.f32 %v736, %v778
    %v780 = vpop.f32.mrf.mxu0
    %v781 = vadd.f32 %v738, %v780
    %v782 = vpop.f32.mrf.mxu0
    %v783 = vadd.f32 %v740, %v782
    %784 = vdwg.mxu0
    %785 = vmatprep.subr.bf16.mxu0 %v538
    %786 = vmatpush1.bf16.msra.mxu0 %v537
    %787 = vmatprep.subr.bf16.mxu0 %v534
    %788 = vmatpush1.bf16.msra.mxu0 %v533
    %789 = vmatprep.subr.bf16.mxu0 %v530
    %790 = vmatpush1.bf16.msra.mxu0 %v529
    %791 = vmatprep.subr.bf16.mxu0 %v526
    %792 = vmatpush1.bf16.msra.mxu0 %v525
    %793 = vmatprep.subr.bf16.mxu0 %v522
    %794 = vmatpush1.bf16.msra.mxu0 %v521
    %795 = vmatprep.subr.bf16.mxu0 %v518
    %796 = vmatpush1.bf16.msra.mxu0 %v517
    %797 = vmatprep.subr.bf16.mxu0 %v514
    %798 = vmatpush1.bf16.msra.mxu0 %v513
    %799 = vmatprep.subr.bf16.mxu0 %v510
    %800 = vmatpush1.bf16.msra.mxu0 %v509
    %801 = vmatprep.subr.bf16.mxu0 %v570
    %802 = vmatpush2.bf16.msra.mxu0 %v569
    %803 = vmatprep.subr.bf16.mxu0 %v566
    %804 = vmatpush2.bf16.msra.mxu0 %v565
    %805 = vmatprep.subr.bf16.mxu0 %v562
    %806 = vmatpush2.bf16.msra.mxu0 %v561
    %807 = vmatprep.subr.bf16.mxu0 %v558
    %808 = vmatpush2.bf16.msra.mxu0 %v557
    %809 = vmatprep.subr.bf16.mxu0 %v554
    %810 = vmatpush2.bf16.msra.mxu0 %v553
    %811 = vmatprep.subr.bf16.mxu0 %v550
    %812 = vmatpush2.bf16.msra.mxu0 %v549
    %813 = vmatprep.subr.bf16.mxu0 %v546
    %814 = vmatpush2.bf16.msra.mxu0 %v545
    %815 = vmatprep.subr.bf16.mxu0 %v542
    %816 = vmatpush2.bf16.msra.mxu0 %v541
    %817 = vmatprep.mubr.bf16.mxu0 %v214
    %818 = vmatmul.mubr.bf16.gmra.mxu0 %v213
    %v819 = vpop.f32.mrf.mxu0
    %v820 = vadd.f32 %v194, %v819
    %v821 = vpop.f32.mrf.mxu0
    %v822 = vadd.f32 %v198, %v821
    %v823 = vpop.f32.mrf.mxu0
    %v824 = vadd.f32 %v194, %v823
    %v825 = vpop.f32.mrf.mxu0
    %v826 = vadd.f32 %v198, %v825
    %827 = vdwg.mxu0
    %828 = vmatprep.subr.bf16.mxu0 %v602
    %829 = vmatpush1.bf16.msra.mxu0 %v601
    %830 = vmatprep.subr.bf16.mxu0 %v598
    %831 = vmatpush1.bf16.msra.mxu0 %v597
    %832 = vmatprep.subr.bf16.mxu0 %v594
    %833 = vmatpush1.bf16.msra.mxu0 %v593
    %834 = vmatprep.subr.bf16.mxu0 %v590
    %835 = vmatpush1.bf16.msra.mxu0 %v589
    %836 = vmatprep.subr.bf16.mxu0 %v586
    %837 = vmatpush1.bf16.msra.mxu0 %v585
    %838 = vmatprep.subr.bf16.mxu0 %v582
    %839 = vmatpush1.bf16.msra.mxu0 %v581
    %840 = vmatprep.subr.bf16.mxu0 %v578
    %841 = vmatpush1.bf16.msra.mxu0 %v577
    %842 = vmatprep.subr.bf16.mxu0 %v574
    %843 = vmatpush1.bf16.msra.mxu0 %v573
    %844 = vmatprep.subr.bf16.mxu0 0
    %845 = vmatpush2.bf16.msra.mxu0 0
    %846 = vmatprep.subr.bf16.mxu0 0
    %847 = vmatpush2.bf16.msra.mxu0 0
    %848 = vmatprep.subr.bf16.mxu0 0
    %849 = vmatpush2.bf16.msra.mxu0 0
    %850 = vmatprep.subr.bf16.mxu0 0
    %851 = vmatpush2.bf16.msra.mxu0 0
    %852 = vmatprep.subr.bf16.mxu0 0
    %853 = vmatpush2.bf16.msra.mxu0 0
    %854 = vmatprep.subr.bf16.mxu0 0
    %855 = vmatpush2.bf16.msra.mxu0 0
    %856 = vmatprep.subr.bf16.mxu0 0
    %857 = vmatpush2.bf16.msra.mxu0 0
    %858 = vmatprep.subr.bf16.mxu0 0
    %859 = vmatpush2.bf16.msra.mxu0 0
    %860 = vmatprep.mubr.bf16.mxu0 0
    %861 = vmatmul.mubr.bf16.gmra.mxu0 %v215
    %v862 = vpop.f32.mrf.mxu0
    %v863 = vadd.f32 %v820, %v862
    %v864 = vpop.f32.mrf.mxu0
    %v865 = vadd.f32 %v822, %v864
    %v866 = vpop.f32.mrf.mxu0
    %v867 = vadd.f32 %v824, %v866
    %v868 = vpop.f32.mrf.mxu0
    %v869 = vadd.f32 %v826, %v868
    %870 = vdwg.mxu0
    %v871 = vxor.u32 %v777, 2147483648
    %v872 = vxor.u32 %v781, 2147483648
    %v873 = vmul.f32 %v871, 1.442695
    %v874 = vpow.pop %v873
    %v875 = vmul.f32 %v872, 1.442695
    %v876 = vpow.pop %v875
    %v877 = vadd.f32 %v874, 1.0
    %v878 = vadd.f32 %v876, 1.0
    %v879 = vrcp.pop %v877
    %v880 = vmul.f32 1.0, %v879
    %v881 = vrcp.pop %v878
    %v882 = vmul.f32 1.0, %v881
    %v883 = vxor.u32 %v779, 2147483648
    %v884 = vxor.u32 %v783, 2147483648
    %v885 = vmul.f32 %v883, 1.442695
    %v886 = vpow.pop %v885
    %v887 = vmul.f32 %v884, 1.442695
    %v888 = vpow.pop %v887
    %v889 = vadd.f32 %v886, 1.0
    %v890 = vadd.f32 %v888, 1.0
    %v891 = vrcp.pop %v889
    %v892 = vmul.f32 1.0, %v891
    %v893 = vrcp.pop %v890
    %v894 = vmul.f32 1.0, %v893
    %v895 = vtanh.pop %v863
    %v896 = vtanh.pop %v867
    %v897 = vxor.u32 %v865, 2147483648
    %v898 = vxor.u32 %v869, 2147483648
    %v899 = vmul.f32 %v897, 1.442695
    %v900 = vpow.pop %v899
    %v901 = vmul.f32 %v898, 1.442695
    %v902 = vpow.pop %v901
    %v903 = vadd.f32 %v900, 1.0
    %v904 = vadd.f32 %v902, 1.0
    %v905 = vrcp.pop %v903
    %v906 = vmul.f32 1.0, %v905
    %v907 = vrcp.pop %v904
    %v908 = vmul.f32 1.0, %v907
    %v909 = vld [vmem:[%s2] sm:$0xff]
    %v910 = vld [vmem:[%s2 + $0x8] sm:$0xff]
    %v911 = vmul.f32 %v892, %v909
    %v912 = vmul.f32 %v894, %v910
    %v913 = vmul.f32 %v880, %v895
    %v914 = vmul.f32 %v882, %v896
    %v915 = vadd.f32 %v911, %v913
    %v916 = vadd.f32 %v912, %v914
    %v917 = vtanh.pop %v915
    %v918 = vtanh.pop %v916
    %v919 = vmul.f32 %v906, %v917
    %v920 = vmul.f32 %v908, %v918
    %921 = vst [vmem:[%s5] sm:$0xff] %v919
    %922 = vst [vmem:[%s5 + $0x8] sm:$0xff] %v920
    %923 = vst [vmem:[%s6] sm:$0xff] %v915
    %924 = vst [vmem:[%s6 + $0x8] sm:$0xff] %v916
    %925 = vst [vmem:[#allocation2 + $0x4] sm:$0xf] 0
    %926 = vst [vmem:[#allocation2 + $0x10] sm:$0xf] 0
    %v927 = vpack.c.bf16 %v920, %v919
    %v929 = vunpack.c.l.b16 %v927
    %v930 = vunpack.c.h.b16 %v927
    %v931 = vpack.c.b16 %v929, %v929
    %v932 = vpack.c.b16 %v930, %v930
    %935 = vst [vmem:[#allocation2] sm:$0xf] %v931
    %936 = vst [vmem:[#allocation2 + $0xc] sm:$0xf] %v932
    %s937 = scalar_lea.vmem %s1, 16
    %v938 = vld [vmem:[%s937] sm:$0xff]
    %v939 = vld [vmem:[%s937 + $0x8] sm:$0xff]
    %v940 = vpack.c.bf16 %v939, %v938
    %v942 = vunpack.c.l.b16 %v940
    %v943 = vunpack.c.h.b16 %v940
    %v944 = vpack.c.b16 %v942, %v942
    %v945 = vpack.c.b16 %v943, %v943
    %948 = vst [vmem:[#allocation2 + $0x8] sm:$0xf] %v944
    %949 = vst [vmem:[#allocation2 + $0x14] sm:$0xf] %v945
    %v950 = vld [vmem:[#allocation2] sm:$0xff]
    %v951 = vld [vmem:[#allocation2 + $0x8] sm:$0xf]
    %v952 = vld [vmem:[#allocation2 + $0xc] sm:$0xff]
    %v953 = vld [vmem:[#allocation2 + $0x14] sm:$0xf]
    %s954 = scalar_lea.vmem [#allocation3], 768
    %v955 = vld [vmem:[%s954] sm:$0xff]
    %v956 = vld [vmem:[%s954 + $0x8] sm:$0xff]
    %v957 = vld [vmem:[%s954 + $0x10] sm:$0xff]
    %v958 = vld [vmem:[%s954 + $0x18] sm:$0xff]
    %v959 = vld [vmem:[%s954 + $0x20] sm:$0xff]
    %v960 = vld [vmem:[%s954 + $0x28] sm:$0xff]
    %v961 = vld [vmem:[%s954 + $0x30] sm:$0xff]
    %v962 = vld [vmem:[%s954 + $0x38] sm:$0xff]
    %v963 = vld [vmem:[%s954 + $0x40] sm:$0xff]
    %v964 = vld [vmem:[%s954 + $0x48] sm:$0xff]
    %v965 = vld [vmem:[%s954 + $0x50] sm:$0xff]
    %v966 = vld [vmem:[%s954 + $0x58] sm:$0xff]
    %v967 = vld [vmem:[%s954 + $0x60] sm:$0xff]
    %v968 = vld [vmem:[%s954 + $0x68] sm:$0xff]
    %v969 = vld [vmem:[%s954 + $0x70] sm:$0xff]
    %v970 = vld [vmem:[%s954 + $0x78] sm:$0xff]
    %v971 = vld [vmem:[%s954 + $0x80] sm:$0xff]
    %v972 = vld [vmem:[%s954 + $0x88] sm:$0xff]
    %v973 = vld [vmem:[%s954 + $0x90] sm:$0xff]
    %v974 = vld [vmem:[%s954 + $0x98] sm:$0xff]
    %v975 = vld [vmem:[%s954 + $0xa0] sm:$0xff]
    %v976 = vld [vmem:[%s954 + $0xa8] sm:$0xff]
    %v977 = vld [vmem:[%s954 + $0xb0] sm:$0xff]
    %v978 = vld [vmem:[%s954 + $0xb8] sm:$0xff]
    %v979 = vld [vmem:[%s954 + $0xc0] sm:$0xff]
    %v980 = vld [vmem:[%s954 + $0xc8] sm:$0xff]
    %v981 = vld [vmem:[%s954 + $0xd0] sm:$0xff]
    %v982 = vld [vmem:[%s954 + $0xd8] sm:$0xff]
    %v983 = vld [vmem:[%s954 + $0xe0] sm:$0xff]
    %v984 = vld [vmem:[%s954 + $0xe8] sm:$0xff]
    %v985 = vld [vmem:[%s954 + $0xf0] sm:$0xff]
    %v986 = vld [vmem:[%s954 + $0xf8] sm:$0xff]
    %v987 = vld [vmem:[%s954 + $0x100] sm:$0xff]
    %v988 = vld [vmem:[%s954 + $0x108] sm:$0xff]
    %v989 = vld [vmem:[%s954 + $0x110] sm:$0xff]
    %v990 = vld [vmem:[%s954 + $0x118] sm:$0xff]
    %v991 = vld [vmem:[%s954 + $0x120] sm:$0xff]
    %v992 = vld [vmem:[%s954 + $0x128] sm:$0xff]
    %v993 = vld [vmem:[%s954 + $0x130] sm:$0xff]
    %v994 = vld [vmem:[%s954 + $0x138] sm:$0xff]
    %v995 = vld [vmem:[%s954 + $0x140] sm:$0xff]
    %v996 = vld [vmem:[%s954 + $0x148] sm:$0xff]
    %v997 = vld [vmem:[%s954 + $0x150] sm:$0xff]
    %v998 = vld [vmem:[%s954 + $0x158] sm:$0xff]
    %v999 = vld [vmem:[%s954 + $0x160] sm:$0xff]
    %v1000 = vld [vmem:[%s954 + $0x168] sm:$0xff]
    %v1001 = vld [vmem:[%s954 + $0x170] sm:$0xff]
    %v1002 = vld [vmem:[%s954 + $0x178] sm:$0xff]
    %v1003 = vld [vmem:[%s954 + $0x180] sm:$0xff]
    %v1004 = vld [vmem:[%s954 + $0x188] sm:$0xff]
    %v1005 = vld [vmem:[%s954 + $0x190] sm:$0xff]
    %v1006 = vld [vmem:[%s954 + $0x198] sm:$0xff]
    %v1007 = vld [vmem:[%s954 + $0x1a0] sm:$0xff]
    %v1008 = vld [vmem:[%s954 + $0x1a8] sm:$0xff]
    %v1009 = vld [vmem:[%s954 + $0x1b0] sm:$0xff]
    %v1010 = vld [vmem:[%s954 + $0x1b8] sm:$0xff]
    %v1011 = vld [vmem:[%s954 + $0x1c0] sm:$0xff]
    %v1012 = vld [vmem:[%s954 + $0x1c8] sm:$0xff]
    %v1013 = vld [vmem:[%s954 + $0x1d0] sm:$0xff]
    %v1014 = vld [vmem:[%s954 + $0x1d8] sm:$0xff]
    %v1015 = vld [vmem:[%s954 + $0x1e0] sm:$0xff]
    %v1016 = vld [vmem:[%s954 + $0x1e8] sm:$0xff]
    %v1017 = vld [vmem:[%s954 + $0x1f0] sm:$0xff]
    %v1018 = vld [vmem:[%s954 + $0x1f8] sm:$0xff]
    %v1019 = vld [vmem:[%s954 + $0x200] sm:$0xff]
    %v1020 = vld [vmem:[%s954 + $0x208] sm:$0xff]
    %v1021 = vld [vmem:[%s954 + $0x210] sm:$0xff]
    %v1022 = vld [vmem:[%s954 + $0x218] sm:$0xff]
    %v1023 = vld [vmem:[%s954 + $0x220] sm:$0xff]
    %v1024 = vld [vmem:[%s954 + $0x228] sm:$0xff]
    %v1025 = vld [vmem:[%s954 + $0x230] sm:$0xff]
    %v1026 = vld [vmem:[%s954 + $0x238] sm:$0xff]
    %v1027 = vld [vmem:[%s954 + $0x240] sm:$0xff]
    %v1028 = vld [vmem:[%s954 + $0x248] sm:$0xff]
    %v1029 = vld [vmem:[%s954 + $0x250] sm:$0xff]
    %v1030 = vld [vmem:[%s954 + $0x258] sm:$0xff]
    %v1031 = vld [vmem:[%s954 + $0x260] sm:$0xff]
    %v1032 = vld [vmem:[%s954 + $0x268] sm:$0xff]
    %v1033 = vld [vmem:[%s954 + $0x270] sm:$0xff]
    %v1034 = vld [vmem:[%s954 + $0x278] sm:$0xff]
    %v1035 = vld [vmem:[%s954 + $0x280] sm:$0xff]
    %v1036 = vld [vmem:[%s954 + $0x288] sm:$0xff]
    %v1037 = vld [vmem:[%s954 + $0x290] sm:$0xff]
    %v1038 = vld [vmem:[%s954 + $0x298] sm:$0xff]
    %v1039 = vld [vmem:[%s954 + $0x2a0] sm:$0xff]
    %v1040 = vld [vmem:[%s954 + $0x2a8] sm:$0xff]
    %v1041 = vld [vmem:[%s954 + $0x2b0] sm:$0xff]
    %v1042 = vld [vmem:[%s954 + $0x2b8] sm:$0xff]
    %v1043 = vld [vmem:[%s954 + $0x2c0] sm:$0xff]
    %v1044 = vld [vmem:[%s954 + $0x2c8] sm:$0xff]
    %v1045 = vld [vmem:[%s954 + $0x2d0] sm:$0xff]
    %v1046 = vld [vmem:[%s954 + $0x2d8] sm:$0xff]
    %v1047 = vld [vmem:[%s954 + $0x2e0] sm:$0xff]
    %v1048 = vld [vmem:[%s954 + $0x2e8] sm:$0xff]
    %v1049 = vld [vmem:[%s954 + $0x2f0] sm:$0xff]
    %v1050 = vld [vmem:[%s954 + $0x2f8] sm:$0xff]
    %s1051 = scalar_lea.vmem [#allocation5], 4
    %v1052 = vld [vmem:[%s1051] sm:$0xf]
    %v1054 = vlaneseq
    %v1055 = vshrl.u32 %v1054, 7
    %v1056 = vsub.s32 0, %v1055
    %v1057 = vrot.slane %v1052, %v1056
    %v1058 = vlaneseq
    %v1059 = vshrl.u32 %v1058, 7
    %v1060 = vsub.s32 1, %v1059
    %v1061 = vrot.slane %v1052, %v1060
    %v1062 = vlaneseq
    %v1063 = vshrl.u32 %v1062, 7
    %v1064 = vsub.s32 2, %v1063
    %v1065 = vrot.slane %v1052, %v1064
    %v1066 = vlaneseq
    %v1067 = vshrl.u32 %v1066, 7
    %v1068 = vsub.s32 3, %v1067
    %v1069 = vrot.slane %v1052, %v1068
    %v1078 = vunpack.c.l.b16 %v950
    %v1079 = vunpack.c.h.b16 %v950
    %v1080 = vunpack.c.l.b16 %v951
    %v1081 = vunpack.c.l.b16 %v952
    %v1082 = vunpack.c.h.b16 %v952
    %v1083 = vunpack.c.l.b16 %v953
    %v1084 = vpack.c.b16 %v1081, %v1078
    %v1085 = vpack.c.b16 %v1082, %v1079
    %v1086 = vpack.c.b16 %v1083, %v1080
    %v1186 = vunpack.c.l.b16 %v955
    %v1187 = vunpack.c.h.b16 %v955
    %v1188 = vunpack.c.l.b16 %v956
    %v1189 = vunpack.c.h.b16 %v956
    %v1190 = vunpack.c.l.b16 %v957
    %v1191 = vunpack.c.h.b16 %v957
    %v1192 = vunpack.c.l.b16 %v958
    %v1193 = vunpack.c.h.b16 %v958
    %v1194 = vunpack.c.l.b16 %v959
    %v1195 = vunpack.c.h.b16 %v959
    %v1196 = vunpack.c.l.b16 %v960
    %v1197 = vunpack.c.h.b16 %v960
    %v1198 = vunpack.c.l.b16 %v961
    %v1199 = vunpack.c.h.b16 %v961
    %v1200 = vunpack.c.l.b16 %v962
    %v1201 = vunpack.c.h.b16 %v962
    %v1202 = vunpack.c.l.b16 %v963
    %v1203 = vunpack.c.h.b16 %v963
    %v1204 = vunpack.c.l.b16 %v964
    %v1205 = vunpack.c.h.b16 %v964
    %v1206 = vunpack.c.l.b16 %v965
    %v1207 = vunpack.c.h.b16 %v965
    %v1208 = vunpack.c.l.b16 %v966
    %v1209 = vunpack.c.h.b16 %v966
    %v1210 = vunpack.c.l.b16 %v967
    %v1211 = vunpack.c.h.b16 %v967
    %v1212 = vunpack.c.l.b16 %v968
    %v1213 = vunpack.c.h.b16 %v968
    %v1214 = vunpack.c.l.b16 %v969
    %v1215 = vunpack.c.h.b16 %v969
    %v1216 = vunpack.c.l.b16 %v970
    %v1217 = vunpack.c.h.b16 %v970
    %v1218 = vunpack.c.l.b16 %v971
    %v1219 = vunpack.c.h.b16 %v971
    %v1220 = vunpack.c.l.b16 %v972
    %v1221 = vunpack.c.h.b16 %v972
    %v1222 = vunpack.c.l.b16 %v973
    %v1223 = vunpack.c.h.b16 %v973
    %v1224 = vunpack.c.l.b16 %v974
    %v1225 = vunpack.c.h.b16 %v974
    %v1226 = vunpack.c.l.b16 %v975
    %v1227 = vunpack.c.h.b16 %v975
    %v1228 = vunpack.c.l.b16 %v976
    %v1229 = vunpack.c.h.b16 %v976
    %v1230 = vunpack.c.l.b16 %v977
    %v1231 = vunpack.c.h.b16 %v977
    %v1232 = vunpack.c.l.b16 %v978
    %v1233 = vunpack.c.h.b16 %v978
    %v1234 = vunpack.c.l.b16 %v979
    %v1235 = vunpack.c.h.b16 %v979
    %v1236 = vunpack.c.l.b16 %v980
    %v1237 = vunpack.c.h.b16 %v980
    %v1238 = vunpack.c.l.b16 %v981
    %v1239 = vunpack.c.h.b16 %v981
    %v1240 = vunpack.c.l.b16 %v982
    %v1241 = vunpack.c.h.b16 %v982
    %v1242 = vunpack.c.l.b16 %v983
    %v1243 = vunpack.c.h.b16 %v983
    %v1244 = vunpack.c.l.b16 %v984
    %v1245 = vunpack.c.h.b16 %v984
    %v1246 = vunpack.c.l.b16 %v985
    %v1247 = vunpack.c.h.b16 %v985
    %v1248 = vunpack.c.l.b16 %v986
    %v1249 = vunpack.c.h.b16 %v986
    %v1250 = vunpack.c.l.b16 %v987
    %v1251 = vunpack.c.h.b16 %v987
    %v1252 = vunpack.c.l.b16 %v988
    %v1253 = vunpack.c.h.b16 %v988
    %v1254 = vunpack.c.l.b16 %v989
    %v1255 = vunpack.c.h.b16 %v989
    %v1256 = vunpack.c.l.b16 %v990
    %v1257 = vunpack.c.h.b16 %v990
    %v1258 = vunpack.c.l.b16 %v991
    %v1259 = vunpack.c.h.b16 %v991
    %v1260 = vunpack.c.l.b16 %v992
    %v1261 = vunpack.c.h.b16 %v992
    %v1262 = vunpack.c.l.b16 %v993
    %v1263 = vunpack.c.h.b16 %v993
    %v1264 = vunpack.c.l.b16 %v994
    %v1265 = vunpack.c.h.b16 %v994
    %v1266 = vunpack.c.l.b16 %v995
    %v1267 = vunpack.c.h.b16 %v995
    %v1268 = vunpack.c.l.b16 %v996
    %v1269 = vunpack.c.h.b16 %v996
    %v1270 = vunpack.c.l.b16 %v997
    %v1271 = vunpack.c.h.b16 %v997
    %v1272 = vunpack.c.l.b16 %v998
    %v1273 = vunpack.c.h.b16 %v998
    %v1274 = vunpack.c.l.b16 %v999
    %v1275 = vunpack.c.h.b16 %v999
    %v1276 = vunpack.c.l.b16 %v1000
    %v1277 = vunpack.c.h.b16 %v1000
    %v1278 = vunpack.c.l.b16 %v1001
    %v1279 = vunpack.c.h.b16 %v1001
    %v1280 = vunpack.c.l.b16 %v1002
    %v1281 = vunpack.c.h.b16 %v1002
    %v1282 = vunpack.c.l.b16 %v1003
    %v1283 = vunpack.c.h.b16 %v1003
    %v1284 = vunpack.c.l.b16 %v1004
    %v1285 = vunpack.c.h.b16 %v1004
    %v1286 = vunpack.c.l.b16 %v1005
    %v1287 = vunpack.c.h.b16 %v1005
    %v1288 = vunpack.c.l.b16 %v1006
    %v1289 = vunpack.c.h.b16 %v1006
    %v1290 = vunpack.c.l.b16 %v1007
    %v1291 = vunpack.c.h.b16 %v1007
    %v1292 = vunpack.c.l.b16 %v1008
    %v1293 = vunpack.c.h.b16 %v1008
    %v1294 = vunpack.c.l.b16 %v1009
    %v1295 = vunpack.c.h.b16 %v1009
    %v1296 = vunpack.c.l.b16 %v1010
    %v1297 = vunpack.c.h.b16 %v1010
    %v1298 = vunpack.c.l.b16 %v1011
    %v1299 = vunpack.c.h.b16 %v1011
    %v1300 = vunpack.c.l.b16 %v1012
    %v1301 = vunpack.c.h.b16 %v1012
    %v1302 = vunpack.c.l.b16 %v1013
    %v1303 = vunpack.c.h.b16 %v1013
    %v1304 = vunpack.c.l.b16 %v1014
    %v1305 = vunpack.c.h.b16 %v1014
    %v1306 = vunpack.c.l.b16 %v1015
    %v1307 = vunpack.c.h.b16 %v1015
    %v1308 = vunpack.c.l.b16 %v1016
    %v1309 = vunpack.c.h.b16 %v1016
    %v1310 = vunpack.c.l.b16 %v1017
    %v1311 = vunpack.c.h.b16 %v1017
    %v1312 = vunpack.c.l.b16 %v1018
    %v1313 = vunpack.c.h.b16 %v1018
    %v1314 = vunpack.c.l.b16 %v1019
    %v1315 = vunpack.c.h.b16 %v1019
    %v1316 = vunpack.c.l.b16 %v1020
    %v1317 = vunpack.c.h.b16 %v1020
    %v1318 = vunpack.c.l.b16 %v1021
    %v1319 = vunpack.c.h.b16 %v1021
    %v1320 = vunpack.c.l.b16 %v1022
    %v1321 = vunpack.c.h.b16 %v1022
    %v1322 = vunpack.c.l.b16 %v1023
    %v1323 = vunpack.c.h.b16 %v1023
    %v1324 = vunpack.c.l.b16 %v1024
    %v1325 = vunpack.c.h.b16 %v1024
    %v1326 = vunpack.c.l.b16 %v1025
    %v1327 = vunpack.c.h.b16 %v1025
    %v1328 = vunpack.c.l.b16 %v1026
    %v1329 = vunpack.c.h.b16 %v1026
    %v1330 = vunpack.c.l.b16 %v1027
    %v1331 = vunpack.c.h.b16 %v1027
    %v1332 = vunpack.c.l.b16 %v1028
    %v1333 = vunpack.c.h.b16 %v1028
    %v1334 = vunpack.c.l.b16 %v1029
    %v1335 = vunpack.c.h.b16 %v1029
    %v1336 = vunpack.c.l.b16 %v1030
    %v1337 = vunpack.c.h.b16 %v1030
    %v1338 = vunpack.c.l.b16 %v1031
    %v1339 = vunpack.c.h.b16 %v1031
    %v1340 = vunpack.c.l.b16 %v1032
    %v1341 = vunpack.c.h.b16 %v1032
    %v1342 = vunpack.c.l.b16 %v1033
    %v1343 = vunpack.c.h.b16 %v1033
    %v1344 = vunpack.c.l.b16 %v1034
    %v1345 = vunpack.c.h.b16 %v1034
    %v1346 = vunpack.c.l.b16 %v1035
    %v1347 = vunpack.c.h.b16 %v1035
    %v1348 = vunpack.c.l.b16 %v1036
    %v1349 = vunpack.c.h.b16 %v1036
    %v1350 = vunpack.c.l.b16 %v1037
    %v1351 = vunpack.c.h.b16 %v1037
    %v1352 = vunpack.c.l.b16 %v1038
    %v1353 = vunpack.c.h.b16 %v1038
    %v1354 = vunpack.c.l.b16 %v1039
    %v1355 = vunpack.c.h.b16 %v1039
    %v1356 = vunpack.c.l.b16 %v1040
    %v1357 = vunpack.c.h.b16 %v1040
    %v1358 = vunpack.c.l.b16 %v1041
    %v1359 = vunpack.c.h.b16 %v1041
    %v1360 = vunpack.c.l.b16 %v1042
    %v1361 = vunpack.c.h.b16 %v1042
    %v1362 = vunpack.c.l.b16 %v1043
    %v1363 = vunpack.c.h.b16 %v1043
    %v1364 = vunpack.c.l.b16 %v1044
    %v1365 = vunpack.c.h.b16 %v1044
    %v1366 = vunpack.c.l.b16 %v1045
    %v1367 = vunpack.c.h.b16 %v1045
    %v1368 = vunpack.c.l.b16 %v1046
    %v1369 = vunpack.c.h.b16 %v1046
    %v1370 = vunpack.c.l.b16 %v1047
    %v1371 = vunpack.c.h.b16 %v1047
    %v1372 = vunpack.c.l.b16 %v1048
    %v1373 = vunpack.c.h.b16 %v1048
    %v1374 = vunpack.c.l.b16 %v1049
    %v1375 = vunpack.c.h.b16 %v1049
    %v1376 = vunpack.c.l.b16 %v1050
    %v1377 = vunpack.c.h.b16 %v1050
    %v1378 = vpack.c.b16 %v1190, %v1186
    %v1379 = vpack.c.b16 %v1191, %v1187
    %v1380 = vpack.c.b16 %v1192, %v1188
    %v1381 = vpack.c.b16 %v1193, %v1189
    %v1382 = vpack.c.b16 %v1198, %v1194
    %v1383 = vpack.c.b16 %v1199, %v1195
    %v1384 = vpack.c.b16 %v1200, %v1196
    %v1385 = vpack.c.b16 %v1201, %v1197
    %v1386 = vpack.c.b16 %v1206, %v1202
    %v1387 = vpack.c.b16 %v1207, %v1203
    %v1388 = vpack.c.b16 %v1208, %v1204
    %v1389 = vpack.c.b16 %v1209, %v1205
    %v1390 = vpack.c.b16 %v1214, %v1210
    %v1391 = vpack.c.b16 %v1215, %v1211
    %v1392 = vpack.c.b16 %v1216, %v1212
    %v1393 = vpack.c.b16 %v1217, %v1213
    %v1394 = vpack.c.b16 %v1222, %v1218
    %v1395 = vpack.c.b16 %v1223, %v1219
    %v1396 = vpack.c.b16 %v1224, %v1220
    %v1397 = vpack.c.b16 %v1225, %v1221
    %v1398 = vpack.c.b16 %v1230, %v1226
    %v1399 = vpack.c.b16 %v1231, %v1227
    %v1400 = vpack.c.b16 %v1232, %v1228
    %v1401 = vpack.c.b16 %v1233, %v1229
    %v1402 = vpack.c.b16 %v1238, %v1234
    %v1403 = vpack.c.b16 %v1239, %v1235
    %v1404 = vpack.c.b16 %v1240, %v1236
    %v1405 = vpack.c.b16 %v1241, %v1237
    %v1406 = vpack.c.b16 %v1246, %v1242
    %v1407 = vpack.c.b16 %v1247, %v1243
    %v1408 = vpack.c.b16 %v1248, %v1244
    %v1409 = vpack.c.b16 %v1249, %v1245
    %v1410 = vpack.c.b16 %v1254, %v1250
    %v1411 = vpack.c.b16 %v1255, %v1251
    %v1412 = vpack.c.b16 %v1256, %v1252
    %v1413 = vpack.c.b16 %v1257, %v1253
    %v1414 = vpack.c.b16 %v1262, %v1258
    %v1415 = vpack.c.b16 %v1263, %v1259
    %v1416 = vpack.c.b16 %v1264, %v1260
    %v1417 = vpack.c.b16 %v1265, %v1261
    %v1418 = vpack.c.b16 %v1270, %v1266
    %v1419 = vpack.c.b16 %v1271, %v1267
    %v1420 = vpack.c.b16 %v1272, %v1268
    %v1421 = vpack.c.b16 %v1273, %v1269
    %v1422 = vpack.c.b16 %v1278, %v1274
    %v1423 = vpack.c.b16 %v1279, %v1275
    %v1424 = vpack.c.b16 %v1280, %v1276
    %v1425 = vpack.c.b16 %v1281, %v1277
    %v1426 = vpack.c.b16 %v1286, %v1282
    %v1427 = vpack.c.b16 %v1287, %v1283
    %v1428 = vpack.c.b16 %v1288, %v1284
    %v1429 = vpack.c.b16 %v1289, %v1285
    %v1430 = vpack.c.b16 %v1294, %v1290
    %v1431 = vpack.c.b16 %v1295, %v1291
    %v1432 = vpack.c.b16 %v1296, %v1292
    %v1433 = vpack.c.b16 %v1297, %v1293
    %v1434 = vpack.c.b16 %v1302, %v1298
    %v1435 = vpack.c.b16 %v1303, %v1299
    %v1436 = vpack.c.b16 %v1304, %v1300
    %v1437 = vpack.c.b16 %v1305, %v1301
    %v1438 = vpack.c.b16 %v1310, %v1306
    %v1439 = vpack.c.b16 %v1311, %v1307
    %v1440 = vpack.c.b16 %v1312, %v1308
    %v1441 = vpack.c.b16 %v1313, %v1309
    %v1442 = vpack.c.b16 %v1318, %v1314
    %v1443 = vpack.c.b16 %v1319, %v1315
    %v1444 = vpack.c.b16 %v1320, %v1316
    %v1445 = vpack.c.b16 %v1321, %v1317
    %v1446 = vpack.c.b16 %v1326, %v1322
    %v1447 = vpack.c.b16 %v1327, %v1323
    %v1448 = vpack.c.b16 %v1328, %v1324
    %v1449 = vpack.c.b16 %v1329, %v1325
    %v1450 = vpack.c.b16 %v1334, %v1330
    %v1451 = vpack.c.b16 %v1335, %v1331
    %v1452 = vpack.c.b16 %v1336, %v1332
    %v1453 = vpack.c.b16 %v1337, %v1333
    %v1454 = vpack.c.b16 %v1342, %v1338
    %v1455 = vpack.c.b16 %v1343, %v1339
    %v1456 = vpack.c.b16 %v1344, %v1340
    %v1457 = vpack.c.b16 %v1345, %v1341
    %v1458 = vpack.c.b16 %v1350, %v1346
    %v1459 = vpack.c.b16 %v1351, %v1347
    %v1460 = vpack.c.b16 %v1352, %v1348
    %v1461 = vpack.c.b16 %v1353, %v1349
    %v1462 = vpack.c.b16 %v1358, %v1354
    %v1463 = vpack.c.b16 %v1359, %v1355
    %v1464 = vpack.c.b16 %v1360, %v1356
    %v1465 = vpack.c.b16 %v1361, %v1357
    %v1466 = vpack.c.b16 %v1366, %v1362
    %v1467 = vpack.c.b16 %v1367, %v1363
    %v1468 = vpack.c.b16 %v1368, %v1364
    %v1469 = vpack.c.b16 %v1369, %v1365
    %v1470 = vpack.c.b16 %v1374, %v1370
    %v1471 = vpack.c.b16 %v1375, %v1371
    %v1472 = vpack.c.b16 %v1376, %v1372
    %v1473 = vpack.c.b16 %v1377, %v1373
    %1570 = vmatprep.subr.bf16.mxu0 %v1407
    %1571 = vmatpush1.bf16.msra.mxu0 %v1406
    %1572 = vmatprep.subr.bf16.mxu0 %v1403
    %1573 = vmatpush1.bf16.msra.mxu0 %v1402
    %1574 = vmatprep.subr.bf16.mxu0 %v1399
    %1575 = vmatpush1.bf16.msra.mxu0 %v1398
    %1576 = vmatprep.subr.bf16.mxu0 %v1395
    %1577 = vmatpush1.bf16.msra.mxu0 %v1394
    %1578 = vmatprep.subr.bf16.mxu0 %v1391
    %1579 = vmatpush1.bf16.msra.mxu0 %v1390
    %1580 = vmatprep.subr.bf16.mxu0 %v1387
    %1581 = vmatpush1.bf16.msra.mxu0 %v1386
    %1582 = vmatprep.subr.bf16.mxu0 %v1383
    %1583 = vmatpush1.bf16.msra.mxu0 %v1382
    %1584 = vmatprep.subr.bf16.mxu0 %v1379
    %1585 = vmatpush1.bf16.msra.mxu0 %v1378
    %1586 = vmatprep.subr.bf16.mxu0 %v1439
    %1587 = vmatpush2.bf16.msra.mxu0 %v1438
    %1588 = vmatprep.subr.bf16.mxu0 %v1435
    %1589 = vmatpush2.bf16.msra.mxu0 %v1434
    %1590 = vmatprep.subr.bf16.mxu0 %v1431
    %1591 = vmatpush2.bf16.msra.mxu0 %v1430
    %1592 = vmatprep.subr.bf16.mxu0 %v1427
    %1593 = vmatpush2.bf16.msra.mxu0 %v1426
    %1594 = vmatprep.subr.bf16.mxu0 %v1423
    %1595 = vmatpush2.bf16.msra.mxu0 %v1422
    %1596 = vmatprep.subr.bf16.mxu0 %v1419
    %1597 = vmatpush2.bf16.msra.mxu0 %v1418
    %1598 = vmatprep.subr.bf16.mxu0 %v1415
    %1599 = vmatpush2.bf16.msra.mxu0 %v1414
    %1600 = vmatprep.subr.bf16.mxu0 %v1411
    %1601 = vmatpush2.bf16.msra.mxu0 %v1410
    %1602 = vmatprep.mubr.bf16.mxu0 %v1085
    %1603 = vmatmul.mubr.bf16.gmra.mxu0 %v1084
    %v1604 = vpop.f32.mrf.mxu0
    %v1605 = vadd.f32 %v1057, %v1604
    %v1606 = vpop.f32.mrf.mxu0
    %v1607 = vadd.f32 %v1061, %v1606
    %v1608 = vpop.f32.mrf.mxu0
    %v1609 = vadd.f32 %v1057, %v1608
    %v1610 = vpop.f32.mrf.mxu0
    %v1611 = vadd.f32 %v1061, %v1610
    %1612 = vdwg.mxu0
    %1613 = vmatprep.subr.bf16.mxu0 %v1471
    %1614 = vmatpush1.bf16.msra.mxu0 %v1470
    %1615 = vmatprep.subr.bf16.mxu0 %v1467
    %1616 = vmatpush1.bf16.msra.mxu0 %v1466
    %1617 = vmatprep.subr.bf16.mxu0 %v1463
    %1618 = vmatpush1.bf16.msra.mxu0 %v1462
    %1619 = vmatprep.subr.bf16.mxu0 %v1459
    %1620 = vmatpush1.bf16.msra.mxu0 %v1458
    %1621 = vmatprep.subr.bf16.mxu0 %v1455
    %1622 = vmatpush1.bf16.msra.mxu0 %v1454
    %1623 = vmatprep.subr.bf16.mxu0 %v1451
    %1624 = vmatpush1.bf16.msra.mxu0 %v1450
    %1625 = vmatprep.subr.bf16.mxu0 %v1447
    %1626 = vmatpush1.bf16.msra.mxu0 %v1446
    %1627 = vmatprep.subr.bf16.mxu0 %v1443
    %1628 = vmatpush1.bf16.msra.mxu0 %v1442
    %1629 = vmatprep.subr.bf16.mxu0 0
    %1630 = vmatpush2.bf16.msra.mxu0 0
    %1631 = vmatprep.subr.bf16.mxu0 0
    %1632 = vmatpush2.bf16.msra.mxu0 0
    %1633 = vmatprep.subr.bf16.mxu0 0
    %1634 = vmatpush2.bf16.msra.mxu0 0
    %1635 = vmatprep.subr.bf16.mxu0 0
    %1636 = vmatpush2.bf16.msra.mxu0 0
    %1637 = vmatprep.subr.bf16.mxu0 0
    %1638 = vmatpush2.bf16.msra.mxu0 0
    %1639 = vmatprep.subr.bf16.mxu0 0
    %1640 = vmatpush2.bf16.msra.mxu0 0
    %1641 = vmatprep.subr.bf16.mxu0 0
    %1642 = vmatpush2.bf16.msra.mxu0 0
    %1643 = vmatprep.subr.bf16.mxu0 0
    %1644 = vmatpush2.bf16.msra.mxu0 0
    %1645 = vmatprep.mubr.bf16.mxu0 0
    %1646 = vmatmul.mubr.bf16.gmra.mxu0 %v1086
    %v1647 = vpop.f32.mrf.mxu0
    %v1648 = vadd.f32 %v1605, %v1647
    %v1649 = vpop.f32.mrf.mxu0
    %v1650 = vadd.f32 %v1607, %v1649
    %v1651 = vpop.f32.mrf.mxu0
    %v1652 = vadd.f32 %v1609, %v1651
    %v1653 = vpop.f32.mrf.mxu0
    %v1654 = vadd.f32 %v1611, %v1653
    %1655 = vdwg.mxu0
    %1656 = vmatprep.subr.bf16.mxu0 %v1409
    %1657 = vmatpush1.bf16.msra.mxu0 %v1408
    %1658 = vmatprep.subr.bf16.mxu0 %v1405
    %1659 = vmatpush1.bf16.msra.mxu0 %v1404
    %1660 = vmatprep.subr.bf16.mxu0 %v1401
    %1661 = vmatpush1.bf16.msra.mxu0 %v1400
    %1662 = vmatprep.subr.bf16.mxu0 %v1397
    %1663 = vmatpush1.bf16.msra.mxu0 %v1396
    %1664 = vmatprep.subr.bf16.mxu0 %v1393
    %1665 = vmatpush1.bf16.msra.mxu0 %v1392
    %1666 = vmatprep.subr.bf16.mxu0 %v1389
    %1667 = vmatpush1.bf16.msra.mxu0 %v1388
    %1668 = vmatprep.subr.bf16.mxu0 %v1385
    %1669 = vmatpush1.bf16.msra.mxu0 %v1384
    %1670 = vmatprep.subr.bf16.mxu0 %v1381
    %1671 = vmatpush1.bf16.msra.mxu0 %v1380
    %1672 = vmatprep.subr.bf16.mxu0 %v1441
    %1673 = vmatpush2.bf16.msra.mxu0 %v1440
    %1674 = vmatprep.subr.bf16.mxu0 %v1437
    %1675 = vmatpush2.bf16.msra.mxu0 %v1436
    %1676 = vmatprep.subr.bf16.mxu0 %v1433
    %1677 = vmatpush2.bf16.msra.mxu0 %v1432
    %1678 = vmatprep.subr.bf16.mxu0 %v1429
    %1679 = vmatpush2.bf16.msra.mxu0 %v1428
    %1680 = vmatprep.subr.bf16.mxu0 %v1425
    %1681 = vmatpush2.bf16.msra.mxu0 %v1424
    %1682 = vmatprep.subr.bf16.mxu0 %v1421
    %1683 = vmatpush2.bf16.msra.mxu0 %v1420
    %1684 = vmatprep.subr.bf16.mxu0 %v1417
    %1685 = vmatpush2.bf16.msra.mxu0 %v1416
    %1686 = vmatprep.subr.bf16.mxu0 %v1413
    %1687 = vmatpush2.bf16.msra.mxu0 %v1412
    %1688 = vmatprep.mubr.bf16.mxu0 %v1085
    %1689 = vmatmul.mubr.bf16.gmra.mxu0 %v1084
    %v1690 = vpop.f32.mrf.mxu0
    %v1691 = vadd.f32 %v1065, %v1690
    %v1692 = vpop.f32.mrf.mxu0
    %v1693 = vadd.f32 %v1069, %v1692
    %v1694 = vpop.f32.mrf.mxu0
    %v1695 = vadd.f32 %v1065, %v1694
    %v1696 = vpop.f32.mrf.mxu0
    %v1697 = vadd.f32 %v1069, %v1696
    %1698 = vdwg.mxu0
    %1699 = vmatprep.subr.bf16.mxu0 %v1473
    %1700 = vmatpush1.bf16.msra.mxu0 %v1472
    %1701 = vmatprep.subr.bf16.mxu0 %v1469
    %1702 = vmatpush1.bf16.msra.mxu0 %v1468
    %1703 = vmatprep.subr.bf16.mxu0 %v1465
    %1704 = vmatpush1.bf16.msra.mxu0 %v1464
    %1705 = vmatprep.subr.bf16.mxu0 %v1461
    %1706 = vmatpush1.bf16.msra.mxu0 %v1460
    %1707 = vmatprep.subr.bf16.mxu0 %v1457
    %1708 = vmatpush1.bf16.msra.mxu0 %v1456
    %1709 = vmatprep.subr.bf16.mxu0 %v1453
    %1710 = vmatpush1.bf16.msra.mxu0 %v1452
    %1711 = vmatprep.subr.bf16.mxu0 %v1449
    %1712 = vmatpush1.bf16.msra.mxu0 %v1448
    %1713 = vmatprep.subr.bf16.mxu0 %v1445
    %1714 = vmatpush1.bf16.msra.mxu0 %v1444
    %1715 = vmatprep.subr.bf16.mxu0 0
    %1716 = vmatpush2.bf16.msra.mxu0 0
    %1717 = vmatprep.subr.bf16.mxu0 0
    %1718 = vmatpush2.bf16.msra.mxu0 0
    %1719 = vmatprep.subr.bf16.mxu0 0
    %1720 = vmatpush2.bf16.msra.mxu0 0
    %1721 = vmatprep.subr.bf16.mxu0 0
    %1722 = vmatpush2.bf16.msra.mxu0 0
    %1723 = vmatprep.subr.bf16.mxu0 0
    %1724 = vmatpush2.bf16.msra.mxu0 0
    %1725 = vmatprep.subr.bf16.mxu0 0
    %1726 = vmatpush2.bf16.msra.mxu0 0
    %1727 = vmatprep.subr.bf16.mxu0 0
    %1728 = vmatpush2.bf16.msra.mxu0 0
    %1729 = vmatprep.subr.bf16.mxu0 0
    %1730 = vmatpush2.bf16.msra.mxu0 0
    %1731 = vmatprep.mubr.bf16.mxu0 0
    %1732 = vmatmul.mubr.bf16.gmra.mxu0 %v1086
    %v1733 = vpop.f32.mrf.mxu0
    %v1734 = vadd.f32 %v1691, %v1733
    %v1735 = vpop.f32.mrf.mxu0
    %v1736 = vadd.f32 %v1693, %v1735
    %v1737 = vpop.f32.mrf.mxu0
    %v1738 = vadd.f32 %v1695, %v1737
    %v1739 = vpop.f32.mrf.mxu0
    %v1740 = vadd.f32 %v1697, %v1739
    %1741 = vdwg.mxu0
    %v1742 = vxor.u32 %v1648, 2147483648
    %v1743 = vxor.u32 %v1652, 2147483648
    %v1744 = vmul.f32 %v1742, 1.442695
    %v1745 = vpow.pop %v1744
    %v1746 = vmul.f32 %v1743, 1.442695
    %v1747 = vpow.pop %v1746
    %v1748 = vadd.f32 %v1745, 1.0
    %v1749 = vadd.f32 %v1747, 1.0
    %v1750 = vrcp.pop %v1748
    %v1751 = vmul.f32 1.0, %v1750
    %v1752 = vrcp.pop %v1749
    %v1753 = vmul.f32 1.0, %v1752
    %v1754 = vxor.u32 %v1650, 2147483648
    %v1755 = vxor.u32 %v1654, 2147483648
    %v1756 = vmul.f32 %v1754, 1.442695
    %v1757 = vpow.pop %v1756
    %v1758 = vmul.f32 %v1755, 1.442695
    %v1759 = vpow.pop %v1758
    %v1760 = vadd.f32 %v1757, 1.0
    %v1761 = vadd.f32 %v1759, 1.0
    %v1762 = vrcp.pop %v1760
    %v1763 = vmul.f32 1.0, %v1762
    %v1764 = vrcp.pop %v1761
    %v1765 = vmul.f32 1.0, %v1764
    %v1766 = vtanh.pop %v1734
    %v1767 = vtanh.pop %v1738
    %v1768 = vxor.u32 %v1736, 2147483648
    %v1769 = vxor.u32 %v1740, 2147483648
    %v1770 = vmul.f32 %v1768, 1.442695
    %v1771 = vpow.pop %v1770
    %v1772 = vmul.f32 %v1769, 1.442695
    %v1773 = vpow.pop %v1772
    %v1774 = vadd.f32 %v1771, 1.0
    %v1775 = vadd.f32 %v1773, 1.0
    %v1776 = vrcp.pop %v1774
    %v1777 = vmul.f32 1.0, %v1776
    %v1778 = vrcp.pop %v1775
    %v1779 = vmul.f32 1.0, %v1778
    %s1780 = scalar_lea.vmem %s2, 16
    %v1781 = vld [vmem:[%s1780] sm:$0xff]
    %v1782 = vld [vmem:[%s1780 + $0x8] sm:$0xff]
    %v1783 = vmul.f32 %v1763, %v1781
    %v1784 = vmul.f32 %v1765, %v1782
    %v1785 = vmul.f32 %v1751, %v1766
    %v1786 = vmul.f32 %v1753, %v1767
    %v1787 = vadd.f32 %v1783, %v1785
    %v1788 = vadd.f32 %v1784, %v1786
    %v1789 = vtanh.pop %v1787
    %v1790 = vtanh.pop %v1788
    %v1791 = vmul.f32 %v1777, %v1789
    %v1792 = vmul.f32 %v1779, %v1790
    %s1793 = scalar_lea.vmem %s5, 16
    %1794 = vst [vmem:[%s1793] sm:$0xff] %v1791
    %1795 = vst [vmem:[%s1793 + $0x8] sm:$0xff] %v1792
    %s1796 = scalar_lea.vmem %s6, 16
    %1797 = vst [vmem:[%s1796] sm:$0xff] %v1787
    %1798 = vst [vmem:[%s1796 + $0x8] sm:$0xff] %v1788
    %v1799 = vpack.c.bf16 %v1792, %v1791
    %v1801 = vunpack.c.l.b16 %v1799
    %v1802 = vunpack.c.h.b16 %v1799
    %v1803 = vpack.c.b16 %v1801, %v1801
    %v1804 = vpack.c.b16 %v1802, %v1802
    %1807 = vst [vmem:[#allocation2] sm:$0xf] %v1803
    %1808 = vst [vmem:[#allocation2 + $0xc] sm:$0xf] %v1804
    %s1809 = scalar_lea.vmem %s1, 32
    %v1810 = vld [vmem:[%s1809] sm:$0xff]
    %v1811 = vld [vmem:[%s1809 + $0x8] sm:$0xff]
    %v1812 = vpack.c.bf16 %v1811, %v1810
    %v1814 = vunpack.c.l.b16 %v1812
    %v1815 = vunpack.c.h.b16 %v1812
    %v1816 = vpack.c.b16 %v1814, %v1814
    %v1817 = vpack.c.b16 %v1815, %v1815
    %1820 = vst [vmem:[#allocation2 + $0x8] sm:$0xf] %v1816
    %1821 = vst [vmem:[#allocation2 + $0x14] sm:$0xf] %v1817
    %v1822 = vld [vmem:[#allocation2] sm:$0xff]
    %v1823 = vld [vmem:[#allocation2 + $0x8] sm:$0xf]
    %v1824 = vld [vmem:[#allocation2 + $0xc] sm:$0xff]
    %v1825 = vld [vmem:[#allocation2 + $0x14] sm:$0xf]
    %s1826 = scalar_lea.vmem [#allocation3], 1536
    %v1827 = vld [vmem:[%s1826] sm:$0xff]
    %v1828 = vld [vmem:[%s1826 + $0x8] sm:$0xff]
    %v1829 = vld [vmem:[%s1826 + $0x10] sm:$0xff]
    %v1830 = vld [vmem:[%s1826 + $0x18] sm:$0xff]
    %v1831 = vld [vmem:[%s1826 + $0x20] sm:$0xff]
    %v1832 = vld [vmem:[%s1826 + $0x28] sm:$0xff]
    %v1833 = vld [vmem:[%s1826 + $0x30] sm:$0xff]
    %v1834 = vld [vmem:[%s1826 + $0x38] sm:$0xff]
    %v1835 = vld [vmem:[%s1826 + $0x40] sm:$0xff]
    %v1836 = vld [vmem:[%s1826 + $0x48] sm:$0xff]
    %v1837 = vld [vmem:[%s1826 + $0x50] sm:$0xff]
    %v1838 = vld [vmem:[%s1826 + $0x58] sm:$0xff]
    %v1839 = vld [vmem:[%s1826 + $0x60] sm:$0xff]
    %v1840 = vld [vmem:[%s1826 + $0x68] sm:$0xff]
    %v1841 = vld [vmem:[%s1826 + $0x70] sm:$0xff]
    %v1842 = vld [vmem:[%s1826 + $0x78] sm:$0xff]
    %v1843 = vld [vmem:[%s1826 + $0x80] sm:$0xff]
    %v1844 = vld [vmem:[%s1826 + $0x88] sm:$0xff]
    %v1845 = vld [vmem:[%s1826 + $0x90] sm:$0xff]
    %v1846 = vld [vmem:[%s1826 + $0x98] sm:$0xff]
    %v1847 = vld [vmem:[%s1826 + $0xa0] sm:$0xff]
    %v1848 = vld [vmem:[%s1826 + $0xa8] sm:$0xff]
    %v1849 = vld [vmem:[%s1826 + $0xb0] sm:$0xff]
    %v1850 = vld [vmem:[%s1826 + $0xb8] sm:$0xff]
    %v1851 = vld [vmem:[%s1826 + $0xc0] sm:$0xff]
    %v1852 = vld [vmem:[%s1826 + $0xc8] sm:$0xff]
    %v1853 = vld [vmem:[%s1826 + $0xd0] sm:$0xff]
    %v1854 = vld [vmem:[%s1826 + $0xd8] sm:$0xff]
    %v1855 = vld [vmem:[%s1826 + $0xe0] sm:$0xff]
    %v1856 = vld [vmem:[%s1826 + $0xe8] sm:$0xff]
    %v1857 = vld [vmem:[%s1826 + $0xf0] sm:$0xff]
    %v1858 = vld [vmem:[%s1826 + $0xf8] sm:$0xff]
    %v1859 = vld [vmem:[%s1826 + $0x100] sm:$0xff]
    %v1860 = vld [vmem:[%s1826 + $0x108] sm:$0xff]
    %v1861 = vld [vmem:[%s1826 + $0x110] sm:$0xff]
    %v1862 = vld [vmem:[%s1826 + $0x118] sm:$0xff]
    %v1863 = vld [vmem:[%s1826 + $0x120] sm:$0xff]
    %v1864 = vld [vmem:[%s1826 + $0x128] sm:$0xff]
    %v1865 = vld [vmem:[%s1826 + $0x130] sm:$0xff]
    %v1866 = vld [vmem:[%s1826 + $0x138] sm:$0xff]
    %v1867 = vld [vmem:[%s1826 + $0x140] sm:$0xff]
    %v1868 = vld [vmem:[%s1826 + $0x148] sm:$0xff]
    %v1869 = vld [vmem:[%s1826 + $0x150] sm:$0xff]
    %v1870 = vld [vmem:[%s1826 + $0x158] sm:$0xff]
    %v1871 = vld [vmem:[%s1826 + $0x160] sm:$0xff]
    %v1872 = vld [vmem:[%s1826 + $0x168] sm:$0xff]
    %v1873 = vld [vmem:[%s1826 + $0x170] sm:$0xff]
    %v1874 = vld [vmem:[%s1826 + $0x178] sm:$0xff]
    %v1875 = vld [vmem:[%s1826 + $0x180] sm:$0xff]
    %v1876 = vld [vmem:[%s1826 + $0x188] sm:$0xff]
    %v1877 = vld [vmem:[%s1826 + $0x190] sm:$0xff]
    %v1878 = vld [vmem:[%s1826 + $0x198] sm:$0xff]
    %v1879 = vld [vmem:[%s1826 + $0x1a0] sm:$0xff]
    %v1880 = vld [vmem:[%s1826 + $0x1a8] sm:$0xff]
    %v1881 = vld [vmem:[%s1826 + $0x1b0] sm:$0xff]
    %v1882 = vld [vmem:[%s1826 + $0x1b8] sm:$0xff]
    %v1883 = vld [vmem:[%s1826 + $0x1c0] sm:$0xff]
    %v1884 = vld [vmem:[%s1826 + $0x1c8] sm:$0xff]
    %v1885 = vld [vmem:[%s1826 + $0x1d0] sm:$0xff]
    %v1886 = vld [vmem:[%s1826 + $0x1d8] sm:$0xff]
    %v1887 = vld [vmem:[%s1826 + $0x1e0] sm:$0xff]
    %v1888 = vld [vmem:[%s1826 + $0x1e8] sm:$0xff]
    %v1889 = vld [vmem:[%s1826 + $0x1f0] sm:$0xff]
    %v1890 = vld [vmem:[%s1826 + $0x1f8] sm:$0xff]
    %v1891 = vld [vmem:[%s1826 + $0x200] sm:$0xff]
    %v1892 = vld [vmem:[%s1826 + $0x208] sm:$0xff]
    %v1893 = vld [vmem:[%s1826 + $0x210] sm:$0xff]
    %v1894 = vld [vmem:[%s1826 + $0x218] sm:$0xff]
    %v1895 = vld [vmem:[%s1826 + $0x220] sm:$0xff]
    %v1896 = vld [vmem:[%s1826 + $0x228] sm:$0xff]
    %v1897 = vld [vmem:[%s1826 + $0x230] sm:$0xff]
    %v1898 = vld [vmem:[%s1826 + $0x238] sm:$0xff]
    %v1899 = vld [vmem:[%s1826 + $0x240] sm:$0xff]
    %v1900 = vld [vmem:[%s1826 + $0x248] sm:$0xff]
    %v1901 = vld [vmem:[%s1826 + $0x250] sm:$0xff]
    %v1902 = vld [vmem:[%s1826 + $0x258] sm:$0xff]
    %v1903 = vld [vmem:[%s1826 + $0x260] sm:$0xff]
    %v1904 = vld [vmem:[%s1826 + $0x268] sm:$0xff]
    %v1905 = vld [vmem:[%s1826 + $0x270] sm:$0xff]
    %v1906 = vld [vmem:[%s1826 + $0x278] sm:$0xff]
    %v1907 = vld [vmem:[%s1826 + $0x280] sm:$0xff]
    %v1908 = vld [vmem:[%s1826 + $0x288] sm:$0xff]
    %v1909 = vld [vmem:[%s1826 + $0x290] sm:$0xff]
    %v1910 = vld [vmem:[%s1826 + $0x298] sm:$0xff]
    %v1911 = vld [vmem:[%s1826 + $0x2a0] sm:$0xff]
    %v1912 = vld [vmem:[%s1826 + $0x2a8] sm:$0xff]
    %v1913 = vld [vmem:[%s1826 + $0x2b0] sm:$0xff]
    %v1914 = vld [vmem:[%s1826 + $0x2b8] sm:$0xff]
    %v1915 = vld [vmem:[%s1826 + $0x2c0] sm:$0xff]
    %v1916 = vld [vmem:[%s1826 + $0x2c8] sm:$0xff]
    %v1917 = vld [vmem:[%s1826 + $0x2d0] sm:$0xff]
    %v1918 = vld [vmem:[%s1826 + $0x2d8] sm:$0xff]
    %v1919 = vld [vmem:[%s1826 + $0x2e0] sm:$0xff]
    %v1920 = vld [vmem:[%s1826 + $0x2e8] sm:$0xff]
    %v1921 = vld [vmem:[%s1826 + $0x2f0] sm:$0xff]
    %v1922 = vld [vmem:[%s1826 + $0x2f8] sm:$0xff]
    %s1923 = scalar_lea.vmem [#allocation5], 8
    %v1924 = vld [vmem:[%s1923] sm:$0xf]
    %v1926 = vlaneseq
    %v1927 = vshrl.u32 %v1926, 7
    %v1928 = vsub.s32 0, %v1927
    %v1929 = vrot.slane %v1924, %v1928
    %v1930 = vlaneseq
    %v1931 = vshrl.u32 %v1930, 7
    %v1932 = vsub.s32 1, %v1931
    %v1933 = vrot.slane %v1924, %v1932
    %v1934 = vlaneseq
    %v1935 = vshrl.u32 %v1934, 7
    %v1936 = vsub.s32 2, %v1935
    %v1937 = vrot.slane %v1924, %v1936
    %v1938 = vlaneseq
    %v1939 = vshrl.u32 %v1938, 7
    %v1940 = vsub.s32 3, %v1939
    %v1941 = vrot.slane %v1924, %v1940
    %v1950 = vunpack.c.l.b16 %v1822
    %v1951 = vunpack.c.h.b16 %v1822
    %v1952 = vunpack.c.l.b16 %v1823
    %v1953 = vunpack.c.l.b16 %v1824
    %v1954 = vunpack.c.h.b16 %v1824
    %v1955 = vunpack.c.l.b16 %v1825
    %v1956 = vpack.c.b16 %v1953, %v1950
    %v1957 = vpack.c.b16 %v1954, %v1951
    %v1958 = vpack.c.b16 %v1955, %v1952
    %v2058 = vunpack.c.l.b16 %v1827
    %v2059 = vunpack.c.h.b16 %v1827
    %v2060 = vunpack.c.l.b16 %v1828
    %v2061 = vunpack.c.h.b16 %v1828
    %v2062 = vunpack.c.l.b16 %v1829
    %v2063 = vunpack.c.h.b16 %v1829
    %v2064 = vunpack.c.l.b16 %v1830
    %v2065 = vunpack.c.h.b16 %v1830
    %v2066 = vunpack.c.l.b16 %v1831
    %v2067 = vunpack.c.h.b16 %v1831
    %v2068 = vunpack.c.l.b16 %v1832
    %v2069 = vunpack.c.h.b16 %v1832
    %v2070 = vunpack.c.l.b16 %v1833
    %v2071 = vunpack.c.h.b16 %v1833
    %v2072 = vunpack.c.l.b16 %v1834
    %v2073 = vunpack.c.h.b16 %v1834
    %v2074 = vunpack.c.l.b16 %v1835
    %v2075 = vunpack.c.h.b16 %v1835
    %v2076 = vunpack.c.l.b16 %v1836
    %v2077 = vunpack.c.h.b16 %v1836
    %v2078 = vunpack.c.l.b16 %v1837
    %v2079 = vunpack.c.h.b16 %v1837
    %v2080 = vunpack.c.l.b16 %v1838
    %v2081 = vunpack.c.h.b16 %v1838
    %v2082 = vunpack.c.l.b16 %v1839
    %v2083 = vunpack.c.h.b16 %v1839
    %v2084 = vunpack.c.l.b16 %v1840
    %v2085 = vunpack.c.h.b16 %v1840
    %v2086 = vunpack.c.l.b16 %v1841
    %v2087 = vunpack.c.h.b16 %v1841
    %v2088 = vunpack.c.l.b16 %v1842
    %v2089 = vunpack.c.h.b16 %v1842
    %v2090 = vunpack.c.l.b16 %v1843
    %v2091 = vunpack.c.h.b16 %v1843
    %v2092 = vunpack.c.l.b16 %v1844
    %v2093 = vunpack.c.h.b16 %v1844
    %v2094 = vunpack.c.l.b16 %v1845
    %v2095 = vunpack.c.h.b16 %v1845
    %v2096 = vunpack.c.l.b16 %v1846
    %v2097 = vunpack.c.h.b16 %v1846
    %v2098 = vunpack.c.l.b16 %v1847
    %v2099 = vunpack.c.h.b16 %v1847
    %v2100 = vunpack.c.l.b16 %v1848
    %v2101 = vunpack.c.h.b16 %v1848
    %v2102 = vunpack.c.l.b16 %v1849
    %v2103 = vunpack.c.h.b16 %v1849
    %v2104 = vunpack.c.l.b16 %v1850
    %v2105 = vunpack.c.h.b16 %v1850
    %v2106 = vunpack.c.l.b16 %v1851
    %v2107 = vunpack.c.h.b16 %v1851
    %v2108 = vunpack.c.l.b16 %v1852
    %v2109 = vunpack.c.h.b16 %v1852
    %v2110 = vunpack.c.l.b16 %v1853
    %v2111 = vunpack.c.h.b16 %v1853
    %v2112 = vunpack.c.l.b16 %v1854
    %v2113 = vunpack.c.h.b16 %v1854
    %v2114 = vunpack.c.l.b16 %v1855
    %v2115 = vunpack.c.h.b16 %v1855
    %v2116 = vunpack.c.l.b16 %v1856
    %v2117 = vunpack.c.h.b16 %v1856
    %v2118 = vunpack.c.l.b16 %v1857
    %v2119 = vunpack.c.h.b16 %v1857
    %v2120 = vunpack.c.l.b16 %v1858
    %v2121 = vunpack.c.h.b16 %v1858
    %v2122 = vunpack.c.l.b16 %v1859
    %v2123 = vunpack.c.h.b16 %v1859
    %v2124 = vunpack.c.l.b16 %v1860
    %v2125 = vunpack.c.h.b16 %v1860
    %v2126 = vunpack.c.l.b16 %v1861
    %v2127 = vunpack.c.h.b16 %v1861
    %v2128 = vunpack.c.l.b16 %v1862
    %v2129 = vunpack.c.h.b16 %v1862
    %v2130 = vunpack.c.l.b16 %v1863
    %v2131 = vunpack.c.h.b16 %v1863
    %v2132 = vunpack.c.l.b16 %v1864
    %v2133 = vunpack.c.h.b16 %v1864
    %v2134 = vunpack.c.l.b16 %v1865
    %v2135 = vunpack.c.h.b16 %v1865
    %v2136 = vunpack.c.l.b16 %v1866
    %v2137 = vunpack.c.h.b16 %v1866
    %v2138 = vunpack.c.l.b16 %v1867
    %v2139 = vunpack.c.h.b16 %v1867
    %v2140 = vunpack.c.l.b16 %v1868
    %v2141 = vunpack.c.h.b16 %v1868
    %v2142 = vunpack.c.l.b16 %v1869
    %v2143 = vunpack.c.h.b16 %v1869
    %v2144 = vunpack.c.l.b16 %v1870
    %v2145 = vunpack.c.h.b16 %v1870
    %v2146 = vunpack.c.l.b16 %v1871
    %v2147 = vunpack.c.h.b16 %v1871
    %v2148 = vunpack.c.l.b16 %v1872
    %v2149 = vunpack.c.h.b16 %v1872
    %v2150 = vunpack.c.l.b16 %v1873
    %v2151 = vunpack.c.h.b16 %v1873
    %v2152 = vunpack.c.l.b16 %v1874
    %v2153 = vunpack.c.h.b16 %v1874
    %v2154 = vunpack.c.l.b16 %v1875
    %v2155 = vunpack.c.h.b16 %v1875
    %v2156 = vunpack.c.l.b16 %v1876
    %v2157 = vunpack.c.h.b16 %v1876
    %v2158 = vunpack.c.l.b16 %v1877
    %v2159 = vunpack.c.h.b16 %v1877
    %v2160 = vunpack.c.l.b16 %v1878
    %v2161 = vunpack.c.h.b16 %v1878
    %v2162 = vunpack.c.l.b16 %v1879
    %v2163 = vunpack.c.h.b16 %v1879
    %v2164 = vunpack.c.l.b16 %v1880
    %v2165 = vunpack.c.h.b16 %v1880
    %v2166 = vunpack.c.l.b16 %v1881
    %v2167 = vunpack.c.h.b16 %v1881
    %v2168 = vunpack.c.l.b16 %v1882
    %v2169 = vunpack.c.h.b16 %v1882
    %v2170 = vunpack.c.l.b16 %v1883
    %v2171 = vunpack.c.h.b16 %v1883
    %v2172 = vunpack.c.l.b16 %v1884
    %v2173 = vunpack.c.h.b16 %v1884
    %v2174 = vunpack.c.l.b16 %v1885
    %v2175 = vunpack.c.h.b16 %v1885
    %v2176 = vunpack.c.l.b16 %v1886
    %v2177 = vunpack.c.h.b16 %v1886
    %v2178 = vunpack.c.l.b16 %v1887
    %v2179 = vunpack.c.h.b16 %v1887
    %v2180 = vunpack.c.l.b16 %v1888
    %v2181 = vunpack.c.h.b16 %v1888
    %v2182 = vunpack.c.l.b16 %v1889
    %v2183 = vunpack.c.h.b16 %v1889
    %v2184 = vunpack.c.l.b16 %v1890
    %v2185 = vunpack.c.h.b16 %v1890
    %v2186 = vunpack.c.l.b16 %v1891
    %v2187 = vunpack.c.h.b16 %v1891
    %v2188 = vunpack.c.l.b16 %v1892
    %v2189 = vunpack.c.h.b16 %v1892
    %v2190 = vunpack.c.l.b16 %v1893
    %v2191 = vunpack.c.h.b16 %v1893
    %v2192 = vunpack.c.l.b16 %v1894
    %v2193 = vunpack.c.h.b16 %v1894
    %v2194 = vunpack.c.l.b16 %v1895
    %v2195 = vunpack.c.h.b16 %v1895
    %v2196 = vunpack.c.l.b16 %v1896
    %v2197 = vunpack.c.h.b16 %v1896
    %v2198 = vunpack.c.l.b16 %v1897
    %v2199 = vunpack.c.h.b16 %v1897
    %v2200 = vunpack.c.l.b16 %v1898
    %v2201 = vunpack.c.h.b16 %v1898
    %v2202 = vunpack.c.l.b16 %v1899
    %v2203 = vunpack.c.h.b16 %v1899
    %v2204 = vunpack.c.l.b16 %v1900
    %v2205 = vunpack.c.h.b16 %v1900
    %v2206 = vunpack.c.l.b16 %v1901
    %v2207 = vunpack.c.h.b16 %v1901
    %v2208 = vunpack.c.l.b16 %v1902
    %v2209 = vunpack.c.h.b16 %v1902
    %v2210 = vunpack.c.l.b16 %v1903
    %v2211 = vunpack.c.h.b16 %v1903
    %v2212 = vunpack.c.l.b16 %v1904
    %v2213 = vunpack.c.h.b16 %v1904
    %v2214 = vunpack.c.l.b16 %v1905
    %v2215 = vunpack.c.h.b16 %v1905
    %v2216 = vunpack.c.l.b16 %v1906
    %v2217 = vunpack.c.h.b16 %v1906
    %v2218 = vunpack.c.l.b16 %v1907
    %v2219 = vunpack.c.h.b16 %v1907
    %v2220 = vunpack.c.l.b16 %v1908
    %v2221 = vunpack.c.h.b16 %v1908
    %v2222 = vunpack.c.l.b16 %v1909
    %v2223 = vunpack.c.h.b16 %v1909
    %v2224 = vunpack.c.l.b16 %v1910
    %v2225 = vunpack.c.h.b16 %v1910
    %v2226 = vunpack.c.l.b16 %v1911
    %v2227 = vunpack.c.h.b16 %v1911
    %v2228 = vunpack.c.l.b16 %v1912
    %v2229 = vunpack.c.h.b16 %v1912
    %v2230 = vunpack.c.l.b16 %v1913
    %v2231 = vunpack.c.h.b16 %v1913
    %v2232 = vunpack.c.l.b16 %v1914
    %v2233 = vunpack.c.h.b16 %v1914
    %v2234 = vunpack.c.l.b16 %v1915
    %v2235 = vunpack.c.h.b16 %v1915
    %v2236 = vunpack.c.l.b16 %v1916
    %v2237 = vunpack.c.h.b16 %v1916
    %v2238 = vunpack.c.l.b16 %v1917
    %v2239 = vunpack.c.h.b16 %v1917
    %v2240 = vunpack.c.l.b16 %v1918
    %v2241 = vunpack.c.h.b16 %v1918
    %v2242 = vunpack.c.l.b16 %v1919
    %v2243 = vunpack.c.h.b16 %v1919
    %v2244 = vunpack.c.l.b16 %v1920
    %v2245 = vunpack.c.h.b16 %v1920
    %v2246 = vunpack.c.l.b16 %v1921
    %v2247 = vunpack.c.h.b16 %v1921
    %v2248 = vunpack.c.l.b16 %v1922
    %v2249 = vunpack.c.h.b16 %v1922
    %v2250 = vpack.c.b16 %v2062, %v2058
    %v2251 = vpack.c.b16 %v2063, %v2059
    %v2252 = vpack.c.b16 %v2064, %v2060
    %v2253 = vpack.c.b16 %v2065, %v2061
    %v2254 = vpack.c.b16 %v2070, %v2066
    %v2255 = vpack.c.b16 %v2071, %v2067
    %v2256 = vpack.c.b16 %v2072, %v2068
    %v2257 = vpack.c.b16 %v2073, %v2069
    %v2258 = vpack.c.b16 %v2078, %v2074
    %v2259 = vpack.c.b16 %v2079, %v2075
    %v2260 = vpack.c.b16 %v2080, %v2076
    %v2261 = vpack.c.b16 %v2081, %v2077
    %v2262 = vpack.c.b16 %v2086, %v2082
    %v2263 = vpack.c.b16 %v2087, %v2083
    %v2264 = vpack.c.b16 %v2088, %v2084
    %v2265 = vpack.c.b16 %v2089, %v2085
    %v2266 = vpack.c.b16 %v2094, %v2090
    %v2267 = vpack.c.b16 %v2095, %v2091
    %v2268 = vpack.c.b16 %v2096, %v2092
    %v2269 = vpack.c.b16 %v2097, %v2093
    %v2270 = vpack.c.b16 %v2102, %v2098
    %v2271 = vpack.c.b16 %v2103, %v2099
    %v2272 = vpack.c.b16 %v2104, %v2100
    %v2273 = vpack.c.b16 %v2105, %v2101
    %v2274 = vpack.c.b16 %v2110, %v2106
    %v2275 = vpack.c.b16 %v2111, %v2107
    %v2276 = vpack.c.b16 %v2112, %v2108
    %v2277 = vpack.c.b16 %v2113, %v2109
    %v2278 = vpack.c.b16 %v2118, %v2114
    %v2279 = vpack.c.b16 %v2119, %v2115
    %v2280 = vpack.c.b16 %v2120, %v2116
    %v2281 = vpack.c.b16 %v2121, %v2117
    %v2282 = vpack.c.b16 %v2126, %v2122
    %v2283 = vpack.c.b16 %v2127, %v2123
    %v2284 = vpack.c.b16 %v2128, %v2124
    %v2285 = vpack.c.b16 %v2129, %v2125
    %v2286 = vpack.c.b16 %v2134, %v2130
    %v2287 = vpack.c.b16 %v2135, %v2131
    %v2288 = vpack.c.b16 %v2136, %v2132
    %v2289 = vpack.c.b16 %v2137, %v2133
    %v2290 = vpack.c.b16 %v2142, %v2138
    %v2291 = vpack.c.b16 %v2143, %v2139
    %v2292 = vpack.c.b16 %v2144, %v2140
    %v2293 = vpack.c.b16 %v2145, %v2141
    %v2294 = vpack.c.b16 %v2150, %v2146
    %v2295 = vpack.c.b16 %v2151, %v2147
    %v2296 = vpack.c.b16 %v2152, %v2148
    %v2297 = vpack.c.b16 %v2153, %v2149
    %v2298 = vpack.c.b16 %v2158, %v2154
    %v2299 = vpack.c.b16 %v2159, %v2155
    %v2300 = vpack.c.b16 %v2160, %v2156
    %v2301 = vpack.c.b16 %v2161, %v2157
    %v2302 = vpack.c.b16 %v2166, %v2162
    %v2303 = vpack.c.b16 %v2167, %v2163
    %v2304 = vpack.c.b16 %v2168, %v2164
    %v2305 = vpack.c.b16 %v2169, %v2165
    %v2306 = vpack.c.b16 %v2174, %v2170
    %v2307 = vpack.c.b16 %v2175, %v2171
    %v2308 = vpack.c.b16 %v2176, %v2172
    %v2309 = vpack.c.b16 %v2177, %v2173
    %v2310 = vpack.c.b16 %v2182, %v2178
    %v2311 = vpack.c.b16 %v2183, %v2179
    %v2312 = vpack.c.b16 %v2184, %v2180
    %v2313 = vpack.c.b16 %v2185, %v2181
    %v2314 = vpack.c.b16 %v2190, %v2186
    %v2315 = vpack.c.b16 %v2191, %v2187
    %v2316 = vpack.c.b16 %v2192, %v2188
    %v2317 = vpack.c.b16 %v2193, %v2189
    %v2318 = vpack.c.b16 %v2198, %v2194
    %v2319 = vpack.c.b16 %v2199, %v2195
    %v2320 = vpack.c.b16 %v2200, %v2196
    %v2321 = vpack.c.b16 %v2201, %v2197
    %v2322 = vpack.c.b16 %v2206, %v2202
    %v2323 = vpack.c.b16 %v2207, %v2203
    %v2324 = vpack.c.b16 %v2208, %v2204
    %v2325 = vpack.c.b16 %v2209, %v2205
    %v2326 = vpack.c.b16 %v2214, %v2210
    %v2327 = vpack.c.b16 %v2215, %v2211
    %v2328 = vpack.c.b16 %v2216, %v2212
    %v2329 = vpack.c.b16 %v2217, %v2213
    %v2330 = vpack.c.b16 %v2222, %v2218
    %v2331 = vpack.c.b16 %v2223, %v2219
    %v2332 = vpack.c.b16 %v2224, %v2220
    %v2333 = vpack.c.b16 %v2225, %v2221
    %v2334 = vpack.c.b16 %v2230, %v2226
    %v2335 = vpack.c.b16 %v2231, %v2227
    %v2336 = vpack.c.b16 %v2232, %v2228
    %v2337 = vpack.c.b16 %v2233, %v2229
    %v2338 = vpack.c.b16 %v2238, %v2234
    %v2339 = vpack.c.b16 %v2239, %v2235
    %v2340 = vpack.c.b16 %v2240, %v2236
    %v2341 = vpack.c.b16 %v2241, %v2237
    %v2342 = vpack.c.b16 %v2246, %v2242
    %v2343 = vpack.c.b16 %v2247, %v2243
    %v2344 = vpack.c.b16 %v2248, %v2244
    %v2345 = vpack.c.b16 %v2249, %v2245
    %2442 = vmatprep.subr.bf16.mxu0 %v2279
    %2443 = vmatpush1.bf16.msra.mxu0 %v2278
    %2444 = vmatprep.subr.bf16.mxu0 %v2275
    %2445 = vmatpush1.bf16.msra.mxu0 %v2274
    %2446 = vmatprep.subr.bf16.mxu0 %v2271
    %2447 = vmatpush1.bf16.msra.mxu0 %v2270
    %2448 = vmatprep.subr.bf16.mxu0 %v2267
    %2449 = vmatpush1.bf16.msra.mxu0 %v2266
    %2450 = vmatprep.subr.bf16.mxu0 %v2263
    %2451 = vmatpush1.bf16.msra.mxu0 %v2262
    %2452 = vmatprep.subr.bf16.mxu0 %v2259
    %2453 = vmatpush1.bf16.msra.mxu0 %v2258
    %2454 = vmatprep.subr.bf16.mxu0 %v2255
    %2455 = vmatpush1.bf16.msra.mxu0 %v2254
    %2456 = vmatprep.subr.bf16.mxu0 %v2251
    %2457 = vmatpush1.bf16.msra.mxu0 %v2250
    %2458 = vmatprep.subr.bf16.mxu0 %v2311
    %2459 = vmatpush2.bf16.msra.mxu0 %v2310
    %2460 = vmatprep.subr.bf16.mxu0 %v2307
    %2461 = vmatpush2.bf16.msra.mxu0 %v2306
    %2462 = vmatprep.subr.bf16.mxu0 %v2303
    %2463 = vmatpush2.bf16.msra.mxu0 %v2302
    %2464 = vmatprep.subr.bf16.mxu0 %v2299
    %2465 = vmatpush2.bf16.msra.mxu0 %v2298
    %2466 = vmatprep.subr.bf16.mxu0 %v2295
    %2467 = vmatpush2.bf16.msra.mxu0 %v2294
    %2468 = vmatprep.subr.bf16.mxu0 %v2291
    %2469 = vmatpush2.bf16.msra.mxu0 %v2290
    %2470 = vmatprep.subr.bf16.mxu0 %v2287
    %2471 = vmatpush2.bf16.msra.mxu0 %v2286
    %2472 = vmatprep.subr.bf16.mxu0 %v2283
    %2473 = vmatpush2.bf16.msra.mxu0 %v2282
    %2474 = vmatprep.mubr.bf16.mxu0 %v1957
    %2475 = vmatmul.mubr.bf16.gmra.mxu0 %v1956
    %v2476 = vpop.f32.mrf.mxu0
    %v2477 = vadd.f32 %v1929, %v2476
    %v2478 = vpop.f32.mrf.mxu0
    %v2479 = vadd.f32 %v1933, %v2478
    %v2480 = vpop.f32.mrf.mxu0
    %v2481 = vadd.f32 %v1929, %v2480
    %v2482 = vpop.f32.mrf.mxu0
    %v2483 = vadd.f32 %v1933, %v2482
    %2484 = vdwg.mxu0
    %2485 = vmatprep.subr.bf16.mxu0 %v2343
    %2486 = vmatpush1.bf16.msra.mxu0 %v2342
    %2487 = vmatprep.subr.bf16.mxu0 %v2339
    %2488 = vmatpush1.bf16.msra.mxu0 %v2338
    %2489 = vmatprep.subr.bf16.mxu0 %v2335
    %2490 = vmatpush1.bf16.msra.mxu0 %v2334
    %2491 = vmatprep.subr.bf16.mxu0 %v2331
    %2492 = vmatpush1.bf16.msra.mxu0 %v2330
    %2493 = vmatprep.subr.bf16.mxu0 %v2327
    %2494 = vmatpush1.bf16.msra.mxu0 %v2326
    %2495 = vmatprep.subr.bf16.mxu0 %v2323
    %2496 = vmatpush1.bf16.msra.mxu0 %v2322
    %2497 = vmatprep.subr.bf16.mxu0 %v2319
    %2498 = vmatpush1.bf16.msra.mxu0 %v2318
    %2499 = vmatprep.subr.bf16.mxu0 %v2315
    %2500 = vmatpush1.bf16.msra.mxu0 %v2314
    %2501 = vmatprep.subr.bf16.mxu0 0
    %2502 = vmatpush2.bf16.msra.mxu0 0
    %2503 = vmatprep.subr.bf16.mxu0 0
    %2504 = vmatpush2.bf16.msra.mxu0 0
    %2505 = vmatprep.subr.bf16.mxu0 0
    %2506 = vmatpush2.bf16.msra.mxu0 0
    %2507 = vmatprep.subr.bf16.mxu0 0
    %2508 = vmatpush2.bf16.msra.mxu0 0
    %2509 = vmatprep.subr.bf16.mxu0 0
    %2510 = vmatpush2.bf16.msra.mxu0 0
    %2511 = vmatprep.subr.bf16.mxu0 0
    %2512 = vmatpush2.bf16.msra.mxu0 0
    %2513 = vmatprep.subr.bf16.mxu0 0
    %2514 = vmatpush2.bf16.msra.mxu0 0
    %2515 = vmatprep.subr.bf16.mxu0 0
    %2516 = vmatpush2.bf16.msra.mxu0 0
    %2517 = vmatprep.mubr.bf16.mxu0 0
    %2518 = vmatmul.mubr.bf16.gmra.mxu0 %v1958
    %v2519 = vpop.f32.mrf.mxu0
    %v2520 = vadd.f32 %v2477, %v2519
    %v2521 = vpop.f32.mrf.mxu0
    %v2522 = vadd.f32 %v2479, %v2521
    %v2523 = vpop.f32.mrf.mxu0
    %v2524 = vadd.f32 %v2481, %v2523
    %v2525 = vpop.f32.mrf.mxu0
    %v2526 = vadd.f32 %v2483, %v2525
    %2527 = vdwg.mxu0
    %2528 = vmatprep.subr.bf16.mxu0 %v2281
    %2529 = vmatpush1.bf16.msra.mxu0 %v2280
    %2530 = vmatprep.subr.bf16.mxu0 %v2277
    %2531 = vmatpush1.bf16.msra.mxu0 %v2276
    %2532 = vmatprep.subr.bf16.mxu0 %v2273
    %2533 = vmatpush1.bf16.msra.mxu0 %v2272
    %2534 = vmatprep.subr.bf16.mxu0 %v2269
    %2535 = vmatpush1.bf16.msra.mxu0 %v2268
    %2536 = vmatprep.subr.bf16.mxu0 %v2265
    %2537 = vmatpush1.bf16.msra.mxu0 %v2264
    %2538 = vmatprep.subr.bf16.mxu0 %v2261
    %2539 = vmatpush1.bf16.msra.mxu0 %v2260
    %2540 = vmatprep.subr.bf16.mxu0 %v2257
    %2541 = vmatpush1.bf16.msra.mxu0 %v2256
    %2542 = vmatprep.subr.bf16.mxu0 %v2253
    %2543 = vmatpush1.bf16.msra.mxu0 %v2252
    %2544 = vmatprep.subr.bf16.mxu0 %v2313
    %2545 = vmatpush2.bf16.msra.mxu0 %v2312
    %2546 = vmatprep.subr.bf16.mxu0 %v2309
    %2547 = vmatpush2.bf16.msra.mxu0 %v2308
    %2548 = vmatprep.subr.bf16.mxu0 %v2305
    %2549 = vmatpush2.bf16.msra.mxu0 %v2304
    %2550 = vmatprep.subr.bf16.mxu0 %v2301
    %2551 = vmatpush2.bf16.msra.mxu0 %v2300
    %2552 = vmatprep.subr.bf16.mxu0 %v2297
    %2553 = vmatpush2.bf16.msra.mxu0 %v2296
    %2554 = vmatprep.subr.bf16.mxu0 %v2293
    %2555 = vmatpush2.bf16.msra.mxu0 %v2292
    %2556 = vmatprep.subr.bf16.mxu0 %v2289
    %2557 = vmatpush2.bf16.msra.mxu0 %v2288
    %2558 = vmatprep.subr.bf16.mxu0 %v2285
    %2559 = vmatpush2.bf16.msra.mxu0 %v2284
    %2560 = vmatprep.mubr.bf16.mxu0 %v1957
    %2561 = vmatmul.mubr.bf16.gmra.mxu0 %v1956
    %v2562 = vpop.f32.mrf.mxu0
    %v2563 = vadd.f32 %v1937, %v2562
    %v2564 = vpop.f32.mrf.mxu0
    %v2565 = vadd.f32 %v1941, %v2564
    %v2566 = vpop.f32.mrf.mxu0
    %v2567 = vadd.f32 %v1937, %v2566
    %v2568 = vpop.f32.mrf.mxu0
    %v2569 = vadd.f32 %v1941, %v2568
    %2570 = vdwg.mxu0
    %2571 = vmatprep.subr.bf16.mxu0 %v2345
    %2572 = vmatpush1.bf16.msra.mxu0 %v2344
    %2573 = vmatprep.subr.bf16.mxu0 %v2341
    %2574 = vmatpush1.bf16.msra.mxu0 %v2340
    %2575 = vmatprep.subr.bf16.mxu0 %v2337
    %2576 = vmatpush1.bf16.msra.mxu0 %v2336
    %2577 = vmatprep.subr.bf16.mxu0 %v2333
    %2578 = vmatpush1.bf16.msra.mxu0 %v2332
    %2579 = vmatprep.subr.bf16.mxu0 %v2329
    %2580 = vmatpush1.bf16.msra.mxu0 %v2328
    %2581 = vmatprep.subr.bf16.mxu0 %v2325
    %2582 = vmatpush1.bf16.msra.mxu0 %v2324
    %2583 = vmatprep.subr.bf16.mxu0 %v2321
    %2584 = vmatpush1.bf16.msra.mxu0 %v2320
    %2585 = vmatprep.subr.bf16.mxu0 %v2317
    %2586 = vmatpush1.bf16.msra.mxu0 %v2316
    %2587 = vmatprep.subr.bf16.mxu0 0
    %2588 = vmatpush2.bf16.msra.mxu0 0
    %2589 = vmatprep.subr.bf16.mxu0 0
    %2590 = vmatpush2.bf16.msra.mxu0 0
    %2591 = vmatprep.subr.bf16.mxu0 0
    %2592 = vmatpush2.bf16.msra.mxu0 0
    %2593 = vmatprep.subr.bf16.mxu0 0
    %2594 = vmatpush2.bf16.msra.mxu0 0
    %2595 = vmatprep.subr.bf16.mxu0 0
    %2596 = vmatpush2.bf16.msra.mxu0 0
    %2597 = vmatprep.subr.bf16.mxu0 0
    %2598 = vmatpush2.bf16.msra.mxu0 0
    %2599 = vmatprep.subr.bf16.mxu0 0
    %2600 = vmatpush2.bf16.msra.mxu0 0
    %2601 = vmatprep.subr.bf16.mxu0 0
    %2602 = vmatpush2.bf16.msra.mxu0 0
    %2603 = vmatprep.mubr.bf16.mxu0 0
    %2604 = vmatmul.mubr.bf16.gmra.mxu0 %v1958
    %v2605 = vpop.f32.mrf.mxu0
    %v2606 = vadd.f32 %v2563, %v2605
    %v2607 = vpop.f32.mrf.mxu0
    %v2608 = vadd.f32 %v2565, %v2607
    %v2609 = vpop.f32.mrf.mxu0
    %v2610 = vadd.f32 %v2567, %v2609
    %v2611 = vpop.f32.mrf.mxu0
    %v2612 = vadd.f32 %v2569, %v2611
    %2613 = vdwg.mxu0
    %v2614 = vxor.u32 %v2520, 2147483648
    %v2615 = vxor.u32 %v2524, 2147483648
    %v2616 = vmul.f32 %v2614, 1.442695
    %v2617 = vpow.pop %v2616
    %v2618 = vmul.f32 %v2615, 1.442695
    %v2619 = vpow.pop %v2618
    %v2620 = vadd.f32 %v2617, 1.0
    %v2621 = vadd.f32 %v2619, 1.0
    %v2622 = vrcp.pop %v2620
    %v2623 = vmul.f32 1.0, %v2622
    %v2624 = vrcp.pop %v2621
    %v2625 = vmul.f32 1.0, %v2624
    %v2626 = vxor.u32 %v2522, 2147483648
    %v2627 = vxor.u32 %v2526, 2147483648
    %v2628 = vmul.f32 %v2626, 1.442695
    %v2629 = vpow.pop %v2628
    %v2630 = vmul.f32 %v2627, 1.442695
    %v2631 = vpow.pop %v2630
    %v2632 = vadd.f32 %v2629, 1.0
    %v2633 = vadd.f32 %v2631, 1.0
    %v2634 = vrcp.pop %v2632
    %v2635 = vmul.f32 1.0, %v2634
    %v2636 = vrcp.pop %v2633
    %v2637 = vmul.f32 1.0, %v2636
    %v2638 = vtanh.pop %v2606
    %v2639 = vtanh.pop %v2610
    %v2640 = vxor.u32 %v2608, 2147483648
    %v2641 = vxor.u32 %v2612, 2147483648
    %v2642 = vmul.f32 %v2640, 1.442695
    %v2643 = vpow.pop %v2642
    %v2644 = vmul.f32 %v2641, 1.442695
    %v2645 = vpow.pop %v2644
    %v2646 = vadd.f32 %v2643, 1.0
    %v2647 = vadd.f32 %v2645, 1.0
    %v2648 = vrcp.pop %v2646
    %v2649 = vmul.f32 1.0, %v2648
    %v2650 = vrcp.pop %v2647
    %v2651 = vmul.f32 1.0, %v2650
    %s2652 = scalar_lea.vmem %s2, 32
    %v2653 = vld [vmem:[%s2652] sm:$0xff]
    %v2654 = vld [vmem:[%s2652 + $0x8] sm:$0xff]
    %v2655 = vmul.f32 %v2635, %v2653
    %v2656 = vmul.f32 %v2637, %v2654
    %v2657 = vmul.f32 %v2623, %v2638
    %v2658 = vmul.f32 %v2625, %v2639
    %v2659 = vadd.f32 %v2655, %v2657
    %v2660 = vadd.f32 %v2656, %v2658
    %v2661 = vtanh.pop %v2659
    %v2662 = vtanh.pop %v2660
    %v2663 = vmul.f32 %v2649, %v2661
    %v2664 = vmul.f32 %v2651, %v2662
    %s2665 = scalar_lea.vmem %s5, 32
    %2666 = vst [vmem:[%s2665] sm:$0xff] %v2663
    %2667 = vst [vmem:[%s2665 + $0x8] sm:$0xff] %v2664
    %s2668 = scalar_lea.vmem %s6, 32
    %2669 = vst [vmem:[%s2668] sm:$0xff] %v2659
    %2670 = vst [vmem:[%s2668 + $0x8] sm:$0xff] %v2660
    // Predicated region
    $region30: #{stacked_lstm_forward_fused.1} parent=1 // pred_check
      _
    $region31: #{stacked_lstm_forward_fused.1} parent=1 // pred_check_branch
      %2672 = sbr.rel (0) target = $region33
    $region32: #{stacked_lstm_forward_fused.1} parent=1 // pred_region
      _
    $region33: #{stacked_lstm_forward_fused.1} parent=1 // pred_fallthru
      _
    // Predicated region
    $region34: #{stacked_lstm_forward_fused.1} parent=1 // pred_check
      _
    $region35: #{stacked_lstm_forward_fused.1} parent=1 // pred_check_branch
      %2674 = sbr.rel (0) target = $region37
    $region36: #{stacked_lstm_forward_fused.1} parent=1 // pred_region
      _
    $region37: #{stacked_lstm_forward_fused.1} parent=1 // pred_fallthru
      _
    // Predicated region
    $region38: #{stacked_lstm_forward_fused.1} parent=1 // pred_check
      _
    $region39: #{stacked_lstm_forward_fused.1} parent=1 // pred_check_branch
      %2676 = sbr.rel (0) target = $region41
    $region40: #{stacked_lstm_forward_fused.1} parent=1 // pred_region
      _
    $region41: #{stacked_lstm_forward_fused.1} parent=1 // pred_fallthru
      _
    // Predicated region
    $region42: #{stacked_lstm_forward_fused.1} parent=1 // pred_check
      _
    $region43: #{stacked_lstm_forward_fused.1} parent=1 // pred_check_branch
      %2678 = sbr.rel (0) target = $region45
    $region44: #{stacked_lstm_forward_fused.1} parent=1 // pred_region
      _
    $region45: #{stacked_lstm_forward_fused.1} parent=1 // pred_fallthru
      _
    %2679 = vsyncpa [#allocation4], 1
    %2680 = vsyncpa [#allocation6], 1

</llo_original>
